<compile_context>
chip_gen: v6e
topology: v6e:2x2x1
jax: 0.10.0
libtpu: 0.0.40
codegen_flags: <defaults>
</compile_context>

<pallas_src>
import functools
import math

import jax
import jax.numpy as jnp
from jax.experimental import pallas as pl
from jax.experimental.pallas import tpu as pltpu

LOG2 = math.log(2.0)
SOFTPLUS_THRESHOLD = 20.0  # matches nn.Softplus(beta=1, threshold=20)
LANE = 128                 # padded lane width for feature / hidden / center dims
SUB = 16                   # sublane padding granularity (bf16-friendly)


def _round_up(x, m):
    return ((x + m - 1) // m) * m


def _ssp(x):
    """ShiftedSoftplus: softplus(x, beta=1, threshold=20) - log(2)."""
    sp = jnp.where(
        x > SOFTPLUS_THRESHOLD,
        x,
        jnp.log1p(jnp.exp(jnp.minimum(x, SOFTPLUS_THRESHOLD))),
    )
    return sp - LOG2


# -------------------- single fused kernel: RBF + all interaction layers --------------------
def _fused_kernel(dists_ref, centers_ref, gather_ref, scatter_ref, node_ref,
                  w_pn_ref, b_pn_ref, w_e1_ref, b_e1_ref, w_e2_ref, b_e2_ref,
                  w_po_ref, b_po_ref, w_io_ref, b_io_ref,
                  out_ref, *, gamma, n_layers):
    f32 = jnp.float32
    bf16 = jnp.bfloat16

    # RBF expansion, lane-dense (centers padded to 128; the padded channels
    # are annihilated by zero rows of w_e1).
    radial = dists_ref[...] - centers_ref[...]          # (E_pad,1)-(1,128) -> (E_pad,128)
    edge_exp = jnp.exp((-gamma) * radial * radial)

    gmat = gather_ref[...]                              # (E_pad, V_pad) bf16, exact one-hot
    smat = scatter_ref[...]                             # (V_pad, E_pad) bf16, exact one-hot
    h = node_ref[...]                                   # (V_pad, 128) f32

    for l in range(n_layers):                           # static unroll, weights stay in VMEM
        # CFConv.project_node: Linear(F -> H)
        hv = jnp.dot(h, w_pn_ref[l], preferred_element_type=f32) + b_pn_ref[l]
        # CFConv.project_edge: Linear -> SSP -> Linear -> SSP
        he = _ssp(jnp.dot(edge_exp, w_e1_ref[l], preferred_element_type=f32) + b_e1_ref[l])
        he = _ssp(jnp.dot(he, w_e2_ref[l], preferred_element_type=f32) + b_e2_ref[l])
        # gather source-node hidden feats per edge: (E,V) @ (V,H)   [u of u_mul_e]
        hv_src = jnp.dot(gmat, hv.astype(bf16), preferred_element_type=f32)
        # u_mul_e message
        msg = hv_src * he
        # fn.sum over incoming edges (segment-sum): (V,E) @ (E,H)
        agg = jnp.dot(smat, msg.astype(bf16), preferred_element_type=f32)
        # CFConv.project_out: Linear(H -> F) + SSP
        conv = _ssp(jnp.dot(agg, w_po_ref[l], preferred_element_type=f32) + b_po_ref[l])
        # Interaction.project_out; 1/max_neighbors and 1/max_neighbor are
        # pre-folded into w_io / b_io host-side.
        h = jnp.dot(conv, w_io_ref[l], preferred_element_type=f32) + b_io_ref[l]

    out_ref[...] = h                                    # (V_pad, 128) lane-dense store


def _fused_call(dists_pad, centers_pad, gather, scatter, node_pad, stacked, gamma):
    n_layers = int(stacked["w_pn"].shape[0])
    v_pad = node_pad.shape[0]
    args = (dists_pad, centers_pad, gather, scatter, node_pad,
            stacked["w_pn"], stacked["b_pn"],
            stacked["w_e1"], stacked["b_e1"],
            stacked["w_e2"], stacked["b_e2"],
            stacked["w_po"], stacked["b_po"],
            stacked["w_io"], stacked["b_io"])
    kernel = functools.partial(_fused_kernel, gamma=float(gamma), n_layers=n_layers)
    return pl.pallas_call(
        kernel,
        out_shape=jax.ShapeDtypeStruct((v_pad, LANE), jnp.float32),
        in_specs=[pl.BlockSpec(memory_space=pltpu.MemorySpace.VMEM)] * len(args),
        out_specs=pl.BlockSpec(memory_space=pltpu.MemorySpace.VMEM),
        compiler_params=pltpu.CompilerParams(vmem_limit_bytes=32 * 1024 * 1024),
    )(*args)


# -------------------- parameter init (PyTorch-like shapes, unpadded) --------------------
def _linear_init(key, fan_in, fan_out):
    kw, kb = jax.random.split(key)
    bound = 1.0 / math.sqrt(fan_in)
    w = jax.random.uniform(kw, (fan_in, fan_out), jnp.float32, -bound, bound)
    b = jax.random.uniform(kb, (fan_out,), jnp.float32, -bound, bound)
    return w, b


def init_params(key, node_feats, hidden_feats, num_node_types, num_centers):
    n_layers = len(hidden_feats)
    keys = jax.random.split(key, 1 + 5 * n_layers)
    params = {
        "embed": jax.random.normal(keys[0], (num_node_types, node_feats), jnp.float32)
    }
    layers = []
    ki = 1
    for H in hidden_feats:
        w_pn, b_pn = _linear_init(keys[ki], node_feats, H); ki += 1
        w_e1, b_e1 = _linear_init(keys[ki], num_centers, H); ki += 1
        w_e2, b_e2 = _linear_init(keys[ki], H, H); ki += 1
        w_po, b_po = _linear_init(keys[ki], H, node_feats); ki += 1
        w_io, b_io = _linear_init(keys[ki], node_feats, node_feats); ki += 1
        layers.append(dict(
            w_pn=w_pn, b_pn=b_pn, w_e1=w_e1, b_e1=b_e1,
            w_e2=w_e2, b_e2=b_e2, w_po=w_po, b_po=b_po,
            w_io=w_io, b_io=b_io,
        ))
    params["layers"] = layers
    return params


# -------------------- pad weights to 128 lanes, stack layers, fold scales --------------------
def _pad_w(w):
    fi, fo = w.shape
    return jnp.zeros((LANE, LANE), jnp.float32).at[:fi, :fo].set(w)


def _pad_b(b):
    return jnp.zeros((1, LANE), jnp.float32).at[0, :b.shape[0]].set(b)


def prepare_padded_params(params, max_neighbors, max_neighbor):
    layers = params["layers"]

    def stack_w(name, scale=1.0):
        return jnp.stack([_pad_w(l[name]) * scale for l in layers])

    def stack_b(name, scale=1.0):
        return jnp.stack([_pad_b(l[name]) * scale for l in layers])

    # Fold:  ((SSP(...)/max_neighbors) @ w_io + b_io) / max_neighbor
    #      = SSP(...) @ (w_io/(max_neighbors*max_neighbor)) + b_io/max_neighbor
    w_io_scale = 1.0 / (float(max_neighbors) * float(max_neighbor))
    b_io_scale = 1.0 / float(max_neighbor)
    return {
        "w_pn": stack_w("w_pn"), "b_pn": stack_b("b_pn"),
        "w_e1": stack_w("w_e1"), "b_e1": stack_b("b_e1"),
        "w_e2": stack_w("w_e2"), "b_e2": stack_b("b_e2"),
        "w_po": stack_w("w_po"), "b_po": stack_b("b_po"),
        "w_io": stack_w("w_io", w_io_scale), "b_io": stack_b("b_io", b_io_scale),
    }


# -------------------- full forward --------------------
@functools.partial(jax.jit, static_argnames=("gamma", "node_feats_dim"))
def schnet_forward(stacked, embed_table, node_types, edge_dists, edge_src, edge_dst,
                   centers, gamma, node_feats_dim):
    V = node_types.shape[0]
    E = edge_dists.shape[0]
    C = centers.shape[0]
    V_pad = _round_up(V, SUB)
    E_pad = _round_up(E, SUB)

    # embedding lookup: tiny table gather (glue), zero-padded to 128 lanes
    nf = jnp.take(embed_table, node_types, axis=0)                       # (V, F)
    node_pad = jnp.zeros((V_pad, LANE), jnp.float32).at[:V, :node_feats_dim].set(nf)

    # RBF inputs, padded
    centers_pad = jnp.zeros((1, LANE), jnp.float32).at[0, :C].set(centers)
    dists_pad = jnp.zeros((E_pad, 1), jnp.float32).at[:E, :].set(edge_dists)

    # incidence matrices as exact bf16 one-hots; padded edge rows stay all-zero
    gather = jnp.zeros((E_pad, V_pad), jnp.bfloat16).at[jnp.arange(E), edge_src].set(1.0)
    scatter = jnp.zeros((V_pad, E_pad), jnp.bfloat16).at[edge_dst, jnp.arange(E)].set(1.0)

    out_pad = _fused_call(dists_pad, centers_pad, gather, scatter, node_pad,
                          stacked, gamma)
    return out_pad[:V, :node_feats_dim]


if __name__ == "__main__":
    key = jax.random.PRNGKey(0)

    # small, module-consistent shapes
    V, E = 8, 16
    node_feats_dim = 32
    hidden_feats = [32, 32, 32]
    num_node_types = 10
    cutoff, gap = 6.0, 0.2
    max_neighbor = 12

    # matches RBFExpansion: num_centers = ceil((high-low)/gap), linspace(low, high, n)
    num_centers = int(math.ceil((cutoff - 0.0) / gap))  # 30
    centers = jnp.linspace(0.0, cutoff, num_centers).astype(jnp.float32)
    gamma = 1.0 / gap

    k1, k2, k3, k4, kp = jax.random.split(key, 5)
    node_types = jax.random.randint(k1, (V,), 0, num_node_types)
    edge_dists = jax.random.uniform(k2, (E, 1), jnp.float32, 0.5, cutoff)
    edge_src = jax.random.randint(k3, (E,), 0, V)
    edge_dst = jax.random.randint(k4, (E,), 0, V)

    params = init_params(kp, node_feats_dim, hidden_feats, num_node_types, num_centers)
    stacked = prepare_padded_params(params, max_neighbors=12, max_neighbor=max_neighbor)

    out = schnet_forward(stacked, params["embed"], node_types, edge_dists,
                         edge_src, edge_dst, centers, float(gamma), node_feats_dim)
    jax.block_until_ready(out)
    assert out.shape == (V, node_feats_dim) and out.dtype == jnp.float32
    assert bool(jnp.all(jnp.isfinite(out)))
    print("KERNEL_OK")
</pallas_src>

<mosaic_0001>
module attributes {stable_mosaic.version = 11 : i64} {
  func.func @_fused_kernel(%arg0: memref<16x1xf32, #tpu.memory_space<vmem>>, %arg1: memref<1x128xf32, #tpu.memory_space<vmem>>, %arg2: memref<16x16xbf16, #tpu.memory_space<vmem>>, %arg3: memref<16x16xbf16, #tpu.memory_space<vmem>>, %arg4: memref<16x128xf32, #tpu.memory_space<vmem>>, %arg5: memref<3x128x128xf32, #tpu.memory_space<vmem>>, %arg6: memref<3x1x128xf32, #tpu.memory_space<vmem>>, %arg7: memref<3x128x128xf32, #tpu.memory_space<vmem>>, %arg8: memref<3x1x128xf32, #tpu.memory_space<vmem>>, %arg9: memref<3x128x128xf32, #tpu.memory_space<vmem>>, %arg10: memref<3x1x128xf32, #tpu.memory_space<vmem>>, %arg11: memref<3x128x128xf32, #tpu.memory_space<vmem>>, %arg12: memref<3x1x128xf32, #tpu.memory_space<vmem>>, %arg13: memref<3x128x128xf32, #tpu.memory_space<vmem>>, %arg14: memref<3x1x128xf32, #tpu.memory_space<vmem>>, %arg15: memref<16x128xf32, #tpu.memory_space<vmem>>) attributes {dimension_semantics = [], scalar_prefetch = 0 : i64, scratch_operands = 0 : i64, tpu.core_type = #tpu.core_type<tc>} {
    %c0 = arith.constant 0 : index
    %c0_0 = arith.constant 0 : index
    %0 = vector.load %arg0[%c0, %c0_0] : memref<16x1xf32, #tpu.memory_space<vmem>>, vector<16x1xf32>
    %c0_1 = arith.constant 0 : index
    %c0_2 = arith.constant 0 : index
    %1 = vector.load %arg1[%c0_1, %c0_2] : memref<1x128xf32, #tpu.memory_space<vmem>>, vector<1x128xf32>
    %2 = vector.broadcast %0 : vector<16x1xf32> to vector<16x128xf32>
    %3 = vector.broadcast %1 : vector<1x128xf32> to vector<16x128xf32>
    %4 = arith.subf %2, %3 : vector<16x128xf32>
    %cst = arith.constant -5.000000e+00 : f32
    %5 = vector.broadcast %cst : f32 to vector<16x128xf32>
    %6 = arith.mulf %5, %4 : vector<16x128xf32>
    %7 = arith.mulf %6, %4 : vector<16x128xf32>
    %8 = math.exp %7 : vector<16x128xf32>
    %c0_3 = arith.constant 0 : index
    %c0_4 = arith.constant 0 : index
    %9 = vector.load %arg2[%c0_3, %c0_4] : memref<16x16xbf16, #tpu.memory_space<vmem>>, vector<16x16xbf16>
    %c0_5 = arith.constant 0 : index
    %c0_6 = arith.constant 0 : index
    %10 = vector.load %arg3[%c0_5, %c0_6] : memref<16x16xbf16, #tpu.memory_space<vmem>>, vector<16x16xbf16>
    %c0_7 = arith.constant 0 : index
    %c0_8 = arith.constant 0 : index
    %11 = vector.load %arg4[%c0_7, %c0_8] : memref<16x128xf32, #tpu.memory_space<vmem>>, vector<16x128xf32>
    %c0_9 = arith.constant 0 : index
    %c0_10 = arith.constant 0 : index
    %c0_11 = arith.constant 0 : index
    %12 = vector.load %arg5[%c0_9, %c0_10, %c0_11] : memref<3x128x128xf32, #tpu.memory_space<vmem>>, vector<1x128x128xf32>
    %13 = vector.shape_cast %12 : vector<1x128x128xf32> to vector<128x128xf32>
    %cst_12 = arith.constant dense<0.000000e+00> : vector<16x128xf32>
    %14 = tpu.matmul %11, %13, %cst_12 {dimension_numbers = #tpu.dot_dimension_numbers<[1], [0], [0], [1], [0, 0, 1, 1], [], []>} : vector<16x128xf32>, vector<128x128xf32>, vector<16x128xf32> -> vector<16x128xf32>
    %c0_13 = arith.constant 0 : index
    %c0_14 = arith.constant 0 : index
    %c0_15 = arith.constant 0 : index
    %15 = vector.load %arg6[%c0_13, %c0_14, %c0_15] : memref<3x1x128xf32, #tpu.memory_space<vmem>>, vector<1x1x128xf32>
    %16 = vector.shape_cast %15 : vector<1x1x128xf32> to vector<1x128xf32>
    %17 = vector.broadcast %16 : vector<1x128xf32> to vector<16x128xf32>
    %18 = arith.addf %14, %17 : vector<16x128xf32>
    %c0_16 = arith.constant 0 : index
    %c0_17 = arith.constant 0 : index
    %c0_18 = arith.constant 0 : index
    %19 = vector.load %arg7[%c0_16, %c0_17, %c0_18] : memref<3x128x128xf32, #tpu.memory_space<vmem>>, vector<1x128x128xf32>
    %20 = vector.shape_cast %19 : vector<1x128x128xf32> to vector<128x128xf32>
    %cst_19 = arith.constant dense<0.000000e+00> : vector<16x128xf32>
    %21 = tpu.matmul %8, %20, %cst_19 {dimension_numbers = #tpu.dot_dimension_numbers<[1], [0], [0], [1], [0, 0, 1, 1], [], []>} : vector<16x128xf32>, vector<128x128xf32>, vector<16x128xf32> -> vector<16x128xf32>
    %c0_20 = arith.constant 0 : index
    %c0_21 = arith.constant 0 : index
    %c0_22 = arith.constant 0 : index
    %22 = vector.load %arg8[%c0_20, %c0_21, %c0_22] : memref<3x1x128xf32, #tpu.memory_space<vmem>>, vector<1x1x128xf32>
    %23 = vector.shape_cast %22 : vector<1x1x128xf32> to vector<1x128xf32>
    %24 = vector.broadcast %23 : vector<1x128xf32> to vector<16x128xf32>
    %25 = arith.addf %21, %24 : vector<16x128xf32>
    %cst_23 = arith.constant 2.000000e+01 : f32
    %26 = vector.broadcast %cst_23 : f32 to vector<16x128xf32>
    %27 = arith.cmpf ogt, %25, %26 : vector<16x128xf32>
    %cst_24 = arith.constant 2.000000e+01 : f32
    %28 = vector.broadcast %cst_24 : f32 to vector<16x128xf32>
    %29 = arith.minimumf %25, %28 : vector<16x128xf32>
    %30 = math.exp %29 : vector<16x128xf32>
    %31 = math.log1p %30 : vector<16x128xf32>
    %32 = arith.select %27, %25, %31 : vector<16x128xi1>, vector<16x128xf32>
    %cst_25 = arith.constant 0.693147182 : f32
    %33 = vector.broadcast %cst_25 : f32 to vector<16x128xf32>
    %34 = arith.subf %32, %33 : vector<16x128xf32>
    %c0_26 = arith.constant 0 : index
    %c0_27 = arith.constant 0 : index
    %c0_28 = arith.constant 0 : index
    %35 = vector.load %arg9[%c0_26, %c0_27, %c0_28] : memref<3x128x128xf32, #tpu.memory_space<vmem>>, vector<1x128x128xf32>
    %36 = vector.shape_cast %35 : vector<1x128x128xf32> to vector<128x128xf32>
    %cst_29 = arith.constant dense<0.000000e+00> : vector<16x128xf32>
    %37 = tpu.matmul %34, %36, %cst_29 {dimension_numbers = #tpu.dot_dimension_numbers<[1], [0], [0], [1], [0, 0, 1, 1], [], []>} : vector<16x128xf32>, vector<128x128xf32>, vector<16x128xf32> -> vector<16x128xf32>
    %c0_30 = arith.constant 0 : index
    %c0_31 = arith.constant 0 : index
    %c0_32 = arith.constant 0 : index
    %38 = vector.load %arg10[%c0_30, %c0_31, %c0_32] : memref<3x1x128xf32, #tpu.memory_space<vmem>>, vector<1x1x128xf32>
    %39 = vector.shape_cast %38 : vector<1x1x128xf32> to vector<1x128xf32>
    %40 = vector.broadcast %39 : vector<1x128xf32> to vector<16x128xf32>
    %41 = arith.addf %37, %40 : vector<16x128xf32>
    %cst_33 = arith.constant 2.000000e+01 : f32
    %42 = vector.broadcast %cst_33 : f32 to vector<16x128xf32>
    %43 = arith.cmpf ogt, %41, %42 : vector<16x128xf32>
    %cst_34 = arith.constant 2.000000e+01 : f32
    %44 = vector.broadcast %cst_34 : f32 to vector<16x128xf32>
    %45 = arith.minimumf %41, %44 : vector<16x128xf32>
    %46 = math.exp %45 : vector<16x128xf32>
    %47 = math.log1p %46 : vector<16x128xf32>
    %48 = arith.select %43, %41, %47 : vector<16x128xi1>, vector<16x128xf32>
    %cst_35 = arith.constant 0.693147182 : f32
    %49 = vector.broadcast %cst_35 : f32 to vector<16x128xf32>
    %50 = arith.subf %48, %49 : vector<16x128xf32>
    %51 = arith.truncf %18 : vector<16x128xf32> to vector<16x128xbf16>
    %cst_36 = arith.constant dense<0.000000e+00> : vector<16x128xf32>
    %52 = tpu.matmul %9, %51, %cst_36 {dimension_numbers = #tpu.dot_dimension_numbers<[1], [0], [0], [1], [0, 0, 1, 1], [], []>} : vector<16x16xbf16>, vector<16x128xbf16>, vector<16x128xf32> -> vector<16x128xf32>
    %53 = arith.mulf %52, %50 : vector<16x128xf32>
    %54 = arith.truncf %53 : vector<16x128xf32> to vector<16x128xbf16>
    %cst_37 = arith.constant dense<0.000000e+00> : vector<16x128xf32>
    %55 = tpu.matmul %10, %54, %cst_37 {dimension_numbers = #tpu.dot_dimension_numbers<[1], [0], [0], [1], [0, 0, 1, 1], [], []>} : vector<16x16xbf16>, vector<16x128xbf16>, vector<16x128xf32> -> vector<16x128xf32>
    %c0_38 = arith.constant 0 : index
    %c0_39 = arith.constant 0 : index
    %c0_40 = arith.constant 0 : index
    %56 = vector.load %arg11[%c0_38, %c0_39, %c0_40] : memref<3x128x128xf32, #tpu.memory_space<vmem>>, vector<1x128x128xf32>
    %57 = vector.shape_cast %56 : vector<1x128x128xf32> to vector<128x128xf32>
    %cst_41 = arith.constant dense<0.000000e+00> : vector<16x128xf32>
    %58 = tpu.matmul %55, %57, %cst_41 {dimension_numbers = #tpu.dot_dimension_numbers<[1], [0], [0], [1], [0, 0, 1, 1], [], []>} : vector<16x128xf32>, vector<128x128xf32>, vector<16x128xf32> -> vector<16x128xf32>
    %c0_42 = arith.constant 0 : index
    %c0_43 = arith.constant 0 : index
    %c0_44 = arith.constant 0 : index
    %59 = vector.load %arg12[%c0_42, %c0_43, %c0_44] : memref<3x1x128xf32, #tpu.memory_space<vmem>>, vector<1x1x128xf32>
    %60 = vector.shape_cast %59 : vector<1x1x128xf32> to vector<1x128xf32>
    %61 = vector.broadcast %60 : vector<1x128xf32> to vector<16x128xf32>
    %62 = arith.addf %58, %61 : vector<16x128xf32>
    %cst_45 = arith.constant 2.000000e+01 : f32
    %63 = vector.broadcast %cst_45 : f32 to vector<16x128xf32>
    %64 = arith.cmpf ogt, %62, %63 : vector<16x128xf32>
    %cst_46 = arith.constant 2.000000e+01 : f32
    %65 = vector.broadcast %cst_46 : f32 to vector<16x128xf32>
    %66 = arith.minimumf %62, %65 : vector<16x128xf32>
    %67 = math.exp %66 : vector<16x128xf32>
    %68 = math.log1p %67 : vector<16x128xf32>
    %69 = arith.select %64, %62, %68 : vector<16x128xi1>, vector<16x128xf32>
    %cst_47 = arith.constant 0.693147182 : f32
    %70 = vector.broadcast %cst_47 : f32 to vector<16x128xf32>
    %71 = arith.subf %69, %70 : vector<16x128xf32>
    %c0_48 = arith.constant 0 : index
    %c0_49 = arith.constant 0 : index
    %c0_50 = arith.constant 0 : index
    %72 = vector.load %arg13[%c0_48, %c0_49, %c0_50] : memref<3x128x128xf32, #tpu.memory_space<vmem>>, vector<1x128x128xf32>
    %73 = vector.shape_cast %72 : vector<1x128x128xf32> to vector<128x128xf32>
    %cst_51 = arith.constant dense<0.000000e+00> : vector<16x128xf32>
    %74 = tpu.matmul %71, %73, %cst_51 {dimension_numbers = #tpu.dot_dimension_numbers<[1], [0], [0], [1], [0, 0, 1, 1], [], []>} : vector<16x128xf32>, vector<128x128xf32>, vector<16x128xf32> -> vector<16x128xf32>
    %c0_52 = arith.constant 0 : index
    %c0_53 = arith.constant 0 : index
    %c0_54 = arith.constant 0 : index
    %75 = vector.load %arg14[%c0_52, %c0_53, %c0_54] : memref<3x1x128xf32, #tpu.memory_space<vmem>>, vector<1x1x128xf32>
    %76 = vector.shape_cast %75 : vector<1x1x128xf32> to vector<1x128xf32>
    %77 = vector.broadcast %76 : vector<1x128xf32> to vector<16x128xf32>
    %78 = arith.addf %74, %77 : vector<16x128xf32>
    %c1 = arith.constant 1 : index
    %c0_55 = arith.constant 0 : index
    %c0_56 = arith.constant 0 : index
    %79 = vector.load %arg5[%c1, %c0_55, %c0_56] : memref<3x128x128xf32, #tpu.memory_space<vmem>>, vector<1x128x128xf32>
    %80 = vector.shape_cast %79 : vector<1x128x128xf32> to vector<128x128xf32>
    %cst_57 = arith.constant dense<0.000000e+00> : vector<16x128xf32>
    %81 = tpu.matmul %78, %80, %cst_57 {dimension_numbers = #tpu.dot_dimension_numbers<[1], [0], [0], [1], [0, 0, 1, 1], [], []>} : vector<16x128xf32>, vector<128x128xf32>, vector<16x128xf32> -> vector<16x128xf32>
    %c1_58 = arith.constant 1 : index
    %c0_59 = arith.constant 0 : index
    %c0_60 = arith.constant 0 : index
    %82 = vector.load %arg6[%c1_58, %c0_59, %c0_60] : memref<3x1x128xf32, #tpu.memory_space<vmem>>, vector<1x1x128xf32>
    %83 = vector.shape_cast %82 : vector<1x1x128xf32> to vector<1x128xf32>
    %84 = vector.broadcast %83 : vector<1x128xf32> to vector<16x128xf32>
    %85 = arith.addf %81, %84 : vector<16x128xf32>
    %c1_61 = arith.constant 1 : index
    %c0_62 = arith.constant 0 : index
    %c0_63 = arith.constant 0 : index
    %86 = vector.load %arg7[%c1_61, %c0_62, %c0_63] : memref<3x128x128xf32, #tpu.memory_space<vmem>>, vector<1x128x128xf32>
    %87 = vector.shape_cast %86 : vector<1x128x128xf32> to vector<128x128xf32>
    %cst_64 = arith.constant dense<0.000000e+00> : vector<16x128xf32>
    %88 = tpu.matmul %8, %87, %cst_64 {dimension_numbers = #tpu.dot_dimension_numbers<[1], [0], [0], [1], [0, 0, 1, 1], [], []>} : vector<16x128xf32>, vector<128x128xf32>, vector<16x128xf32> -> vector<16x128xf32>
    %c1_65 = arith.constant 1 : index
    %c0_66 = arith.constant 0 : index
    %c0_67 = arith.constant 0 : index
    %89 = vector.load %arg8[%c1_65, %c0_66, %c0_67] : memref<3x1x128xf32, #tpu.memory_space<vmem>>, vector<1x1x128xf32>
    %90 = vector.shape_cast %89 : vector<1x1x128xf32> to vector<1x128xf32>
    %91 = vector.broadcast %90 : vector<1x128xf32> to vector<16x128xf32>
    %92 = arith.addf %88, %91 : vector<16x128xf32>
    %cst_68 = arith.constant 2.000000e+01 : f32
    %93 = vector.broadcast %cst_68 : f32 to vector<16x128xf32>
    %94 = arith.cmpf ogt, %92, %93 : vector<16x128xf32>
    %cst_69 = arith.constant 2.000000e+01 : f32
    %95 = vector.broadcast %cst_69 : f32 to vector<16x128xf32>
    %96 = arith.minimumf %92, %95 : vector<16x128xf32>
    %97 = math.exp %96 : vector<16x128xf32>
    %98 = math.log1p %97 : vector<16x128xf32>
    %99 = arith.select %94, %92, %98 : vector<16x128xi1>, vector<16x128xf32>
    %cst_70 = arith.constant 0.693147182 : f32
    %100 = vector.broadcast %cst_70 : f32 to vector<16x128xf32>
    %101 = arith.subf %99, %100 : vector<16x128xf32>
    %c1_71 = arith.constant 1 : index
    %c0_72 = arith.constant 0 : index
    %c0_73 = arith.constant 0 : index
    %102 = vector.load %arg9[%c1_71, %c0_72, %c0_73] : memref<3x128x128xf32, #tpu.memory_space<vmem>>, vector<1x128x128xf32>
    %103 = vector.shape_cast %102 : vector<1x128x128xf32> to vector<128x128xf32>
    %cst_74 = arith.constant dense<0.000000e+00> : vector<16x128xf32>
    %104 = tpu.matmul %101, %103, %cst_74 {dimension_numbers = #tpu.dot_dimension_numbers<[1], [0], [0], [1], [0, 0, 1, 1], [], []>} : vector<16x128xf32>, vector<128x128xf32>, vector<16x128xf32> -> vector<16x128xf32>
    %c1_75 = arith.constant 1 : index
    %c0_76 = arith.constant 0 : index
    %c0_77 = arith.constant 0 : index
    %105 = vector.load %arg10[%c1_75, %c0_76, %c0_77] : memref<3x1x128xf32, #tpu.memory_space<vmem>>, vector<1x1x128xf32>
    %106 = vector.shape_cast %105 : vector<1x1x128xf32> to vector<1x128xf32>
    %107 = vector.broadcast %106 : vector<1x128xf32> to vector<16x128xf32>
    %108 = arith.addf %104, %107 : vector<16x128xf32>
    %cst_78 = arith.constant 2.000000e+01 : f32
    %109 = vector.broadcast %cst_78 : f32 to vector<16x128xf32>
    %110 = arith.cmpf ogt, %108, %109 : vector<16x128xf32>
    %cst_79 = arith.constant 2.000000e+01 : f32
    %111 = vector.broadcast %cst_79 : f32 to vector<16x128xf32>
    %112 = arith.minimumf %108, %111 : vector<16x128xf32>
    %113 = math.exp %112 : vector<16x128xf32>
    %114 = math.log1p %113 : vector<16x128xf32>
    %115 = arith.select %110, %108, %114 : vector<16x128xi1>, vector<16x128xf32>
    %cst_80 = arith.constant 0.693147182 : f32
    %116 = vector.broadcast %cst_80 : f32 to vector<16x128xf32>
    %117 = arith.subf %115, %116 : vector<16x128xf32>
    %118 = arith.truncf %85 : vector<16x128xf32> to vector<16x128xbf16>
    %cst_81 = arith.constant dense<0.000000e+00> : vector<16x128xf32>
    %119 = tpu.matmul %9, %118, %cst_81 {dimension_numbers = #tpu.dot_dimension_numbers<[1], [0], [0], [1], [0, 0, 1, 1], [], []>} : vector<16x16xbf16>, vector<16x128xbf16>, vector<16x128xf32> -> vector<16x128xf32>
    %120 = arith.mulf %119, %117 : vector<16x128xf32>
    %121 = arith.truncf %120 : vector<16x128xf32> to vector<16x128xbf16>
    %cst_82 = arith.constant dense<0.000000e+00> : vector<16x128xf32>
    %122 = tpu.matmul %10, %121, %cst_82 {dimension_numbers = #tpu.dot_dimension_numbers<[1], [0], [0], [1], [0, 0, 1, 1], [], []>} : vector<16x16xbf16>, vector<16x128xbf16>, vector<16x128xf32> -> vector<16x128xf32>
    %c1_83 = arith.constant 1 : index
    %c0_84 = arith.constant 0 : index
    %c0_85 = arith.constant 0 : index
    %123 = vector.load %arg11[%c1_83, %c0_84, %c0_85] : memref<3x128x128xf32, #tpu.memory_space<vmem>>, vector<1x128x128xf32>
    %124 = vector.shape_cast %123 : vector<1x128x128xf32> to vector<128x128xf32>
    %cst_86 = arith.constant dense<0.000000e+00> : vector<16x128xf32>
    %125 = tpu.matmul %122, %124, %cst_86 {dimension_numbers = #tpu.dot_dimension_numbers<[1], [0], [0], [1], [0, 0, 1, 1], [], []>} : vector<16x128xf32>, vector<128x128xf32>, vector<16x128xf32> -> vector<16x128xf32>
    %c1_87 = arith.constant 1 : index
    %c0_88 = arith.constant 0 : index
    %c0_89 = arith.constant 0 : index
    %126 = vector.load %arg12[%c1_87, %c0_88, %c0_89] : memref<3x1x128xf32, #tpu.memory_space<vmem>>, vector<1x1x128xf32>
    %127 = vector.shape_cast %126 : vector<1x1x128xf32> to vector<1x128xf32>
    %128 = vector.broadcast %127 : vector<1x128xf32> to vector<16x128xf32>
    %129 = arith.addf %125, %128 : vector<16x128xf32>
    %cst_90 = arith.constant 2.000000e+01 : f32
    %130 = vector.broadcast %cst_90 : f32 to vector<16x128xf32>
    %131 = arith.cmpf ogt, %129, %130 : vector<16x128xf32>
    %cst_91 = arith.constant 2.000000e+01 : f32
    %132 = vector.broadcast %cst_91 : f32 to vector<16x128xf32>
    %133 = arith.minimumf %129, %132 : vector<16x128xf32>
    %134 = math.exp %133 : vector<16x128xf32>
    %135 = math.log1p %134 : vector<16x128xf32>
    %136 = arith.select %131, %129, %135 : vector<16x128xi1>, vector<16x128xf32>
    %cst_92 = arith.constant 0.693147182 : f32
    %137 = vector.broadcast %cst_92 : f32 to vector<16x128xf32>
    %138 = arith.subf %136, %137 : vector<16x128xf32>
    %c1_93 = arith.constant 1 : index
    %c0_94 = arith.constant 0 : index
    %c0_95 = arith.constant 0 : index
    %139 = vector.load %arg13[%c1_93, %c0_94, %c0_95] : memref<3x128x128xf32, #tpu.memory_space<vmem>>, vector<1x128x128xf32>
    %140 = vector.shape_cast %139 : vector<1x128x128xf32> to vector<128x128xf32>
    %cst_96 = arith.constant dense<0.000000e+00> : vector<16x128xf32>
    %141 = tpu.matmul %138, %140, %cst_96 {dimension_numbers = #tpu.dot_dimension_numbers<[1], [0], [0], [1], [0, 0, 1, 1], [], []>} : vector<16x128xf32>, vector<128x128xf32>, vector<16x128xf32> -> vector<16x128xf32>
    %c1_97 = arith.constant 1 : index
    %c0_98 = arith.constant 0 : index
    %c0_99 = arith.constant 0 : index
    %142 = vector.load %arg14[%c1_97, %c0_98, %c0_99] : memref<3x1x128xf32, #tpu.memory_space<vmem>>, vector<1x1x128xf32>
    %143 = vector.shape_cast %142 : vector<1x1x128xf32> to vector<1x128xf32>
    %144 = vector.broadcast %143 : vector<1x128xf32> to vector<16x128xf32>
    %145 = arith.addf %141, %144 : vector<16x128xf32>
    %c2 = arith.constant 2 : index
    %c0_100 = arith.constant 0 : index
    %c0_101 = arith.constant 0 : index
    %146 = vector.load %arg5[%c2, %c0_100, %c0_101] : memref<3x128x128xf32, #tpu.memory_space<vmem>>, vector<1x128x128xf32>
    %147 = vector.shape_cast %146 : vector<1x128x128xf32> to vector<128x128xf32>
    %cst_102 = arith.constant dense<0.000000e+00> : vector<16x128xf32>
    %148 = tpu.matmul %145, %147, %cst_102 {dimension_numbers = #tpu.dot_dimension_numbers<[1], [0], [0], [1], [0, 0, 1, 1], [], []>} : vector<16x128xf32>, vector<128x128xf32>, vector<16x128xf32> -> vector<16x128xf32>
    %c2_103 = arith.constant 2 : index
    %c0_104 = arith.constant 0 : index
    %c0_105 = arith.constant 0 : index
    %149 = vector.load %arg6[%c2_103, %c0_104, %c0_105] : memref<3x1x128xf32, #tpu.memory_space<vmem>>, vector<1x1x128xf32>
    %150 = vector.shape_cast %149 : vector<1x1x128xf32> to vector<1x128xf32>
    %151 = vector.broadcast %150 : vector<1x128xf32> to vector<16x128xf32>
    %152 = arith.addf %148, %151 : vector<16x128xf32>
    %c2_106 = arith.constant 2 : index
    %c0_107 = arith.constant 0 : index
    %c0_108 = arith.constant 0 : index
    %153 = vector.load %arg7[%c2_106, %c0_107, %c0_108] : memref<3x128x128xf32, #tpu.memory_space<vmem>>, vector<1x128x128xf32>
    %154 = vector.shape_cast %153 : vector<1x128x128xf32> to vector<128x128xf32>
    %cst_109 = arith.constant dense<0.000000e+00> : vector<16x128xf32>
    %155 = tpu.matmul %8, %154, %cst_109 {dimension_numbers = #tpu.dot_dimension_numbers<[1], [0], [0], [1], [0, 0, 1, 1], [], []>} : vector<16x128xf32>, vector<128x128xf32>, vector<16x128xf32> -> vector<16x128xf32>
    %c2_110 = arith.constant 2 : index
    %c0_111 = arith.constant 0 : index
    %c0_112 = arith.constant 0 : index
    %156 = vector.load %arg8[%c2_110, %c0_111, %c0_112] : memref<3x1x128xf32, #tpu.memory_space<vmem>>, vector<1x1x128xf32>
    %157 = vector.shape_cast %156 : vector<1x1x128xf32> to vector<1x128xf32>
    %158 = vector.broadcast %157 : vector<1x128xf32> to vector<16x128xf32>
    %159 = arith.addf %155, %158 : vector<16x128xf32>
    %cst_113 = arith.constant 2.000000e+01 : f32
    %160 = vector.broadcast %cst_113 : f32 to vector<16x128xf32>
    %161 = arith.cmpf ogt, %159, %160 : vector<16x128xf32>
    %cst_114 = arith.constant 2.000000e+01 : f32
    %162 = vector.broadcast %cst_114 : f32 to vector<16x128xf32>
    %163 = arith.minimumf %159, %162 : vector<16x128xf32>
    %164 = math.exp %163 : vector<16x128xf32>
    %165 = math.log1p %164 : vector<16x128xf32>
    %166 = arith.select %161, %159, %165 : vector<16x128xi1>, vector<16x128xf32>
    %cst_115 = arith.constant 0.693147182 : f32
    %167 = vector.broadcast %cst_115 : f32 to vector<16x128xf32>
    %168 = arith.subf %166, %167 : vector<16x128xf32>
    %c2_116 = arith.constant 2 : index
    %c0_117 = arith.constant 0 : index
    %c0_118 = arith.constant 0 : index
    %169 = vector.load %arg9[%c2_116, %c0_117, %c0_118] : memref<3x128x128xf32, #tpu.memory_space<vmem>>, vector<1x128x128xf32>
    %170 = vector.shape_cast %169 : vector<1x128x128xf32> to vector<128x128xf32>
    %cst_119 = arith.constant dense<0.000000e+00> : vector<16x128xf32>
    %171 = tpu.matmul %168, %170, %cst_119 {dimension_numbers = #tpu.dot_dimension_numbers<[1], [0], [0], [1], [0, 0, 1, 1], [], []>} : vector<16x128xf32>, vector<128x128xf32>, vector<16x128xf32> -> vector<16x128xf32>
    %c2_120 = arith.constant 2 : index
    %c0_121 = arith.constant 0 : index
    %c0_122 = arith.constant 0 : index
    %172 = vector.load %arg10[%c2_120, %c0_121, %c0_122] : memref<3x1x128xf32, #tpu.memory_space<vmem>>, vector<1x1x128xf32>
    %173 = vector.shape_cast %172 : vector<1x1x128xf32> to vector<1x128xf32>
    %174 = vector.broadcast %173 : vector<1x128xf32> to vector<16x128xf32>
    %175 = arith.addf %171, %174 : vector<16x128xf32>
    %cst_123 = arith.constant 2.000000e+01 : f32
    %176 = vector.broadcast %cst_123 : f32 to vector<16x128xf32>
    %177 = arith.cmpf ogt, %175, %176 : vector<16x128xf32>
    %cst_124 = arith.constant 2.000000e+01 : f32
    %178 = vector.broadcast %cst_124 : f32 to vector<16x128xf32>
    %179 = arith.minimumf %175, %178 : vector<16x128xf32>
    %180 = math.exp %179 : vector<16x128xf32>
    %181 = math.log1p %180 : vector<16x128xf32>
    %182 = arith.select %177, %175, %181 : vector<16x128xi1>, vector<16x128xf32>
    %cst_125 = arith.constant 0.693147182 : f32
    %183 = vector.broadcast %cst_125 : f32 to vector<16x128xf32>
    %184 = arith.subf %182, %183 : vector<16x128xf32>
    %185 = arith.truncf %152 : vector<16x128xf32> to vector<16x128xbf16>
    %cst_126 = arith.constant dense<0.000000e+00> : vector<16x128xf32>
    %186 = tpu.matmul %9, %185, %cst_126 {dimension_numbers = #tpu.dot_dimension_numbers<[1], [0], [0], [1], [0, 0, 1, 1], [], []>} : vector<16x16xbf16>, vector<16x128xbf16>, vector<16x128xf32> -> vector<16x128xf32>
    %187 = arith.mulf %186, %184 : vector<16x128xf32>
    %188 = arith.truncf %187 : vector<16x128xf32> to vector<16x128xbf16>
    %cst_127 = arith.constant dense<0.000000e+00> : vector<16x128xf32>
    %189 = tpu.matmul %10, %188, %cst_127 {dimension_numbers = #tpu.dot_dimension_numbers<[1], [0], [0], [1], [0, 0, 1, 1], [], []>} : vector<16x16xbf16>, vector<16x128xbf16>, vector<16x128xf32> -> vector<16x128xf32>
    %c2_128 = arith.constant 2 : index
    %c0_129 = arith.constant 0 : index
    %c0_130 = arith.constant 0 : index
    %190 = vector.load %arg11[%c2_128, %c0_129, %c0_130] : memref<3x128x128xf32, #tpu.memory_space<vmem>>, vector<1x128x128xf32>
    %191 = vector.shape_cast %190 : vector<1x128x128xf32> to vector<128x128xf32>
    %cst_131 = arith.constant dense<0.000000e+00> : vector<16x128xf32>
    %192 = tpu.matmul %189, %191, %cst_131 {dimension_numbers = #tpu.dot_dimension_numbers<[1], [0], [0], [1], [0, 0, 1, 1], [], []>} : vector<16x128xf32>, vector<128x128xf32>, vector<16x128xf32> -> vector<16x128xf32>
    %c2_132 = arith.constant 2 : index
    %c0_133 = arith.constant 0 : index
    %c0_134 = arith.constant 0 : index
    %193 = vector.load %arg12[%c2_132, %c0_133, %c0_134] : memref<3x1x128xf32, #tpu.memory_space<vmem>>, vector<1x1x128xf32>
    %194 = vector.shape_cast %193 : vector<1x1x128xf32> to vector<1x128xf32>
    %195 = vector.broadcast %194 : vector<1x128xf32> to vector<16x128xf32>
    %196 = arith.addf %192, %195 : vector<16x128xf32>
    %cst_135 = arith.constant 2.000000e+01 : f32
    %197 = vector.broadcast %cst_135 : f32 to vector<16x128xf32>
    %198 = arith.cmpf ogt, %196, %197 : vector<16x128xf32>
    %cst_136 = arith.constant 2.000000e+01 : f32
    %199 = vector.broadcast %cst_136 : f32 to vector<16x128xf32>
    %200 = arith.minimumf %196, %199 : vector<16x128xf32>
    %201 = math.exp %200 : vector<16x128xf32>
    %202 = math.log1p %201 : vector<16x128xf32>
    %203 = arith.select %198, %196, %202 : vector<16x128xi1>, vector<16x128xf32>
    %cst_137 = arith.constant 0.693147182 : f32
    %204 = vector.broadcast %cst_137 : f32 to vector<16x128xf32>
    %205 = arith.subf %203, %204 : vector<16x128xf32>
    %c2_138 = arith.constant 2 : index
    %c0_139 = arith.constant 0 : index
    %c0_140 = arith.constant 0 : index
    %206 = vector.load %arg13[%c2_138, %c0_139, %c0_140] : memref<3x128x128xf32, #tpu.memory_space<vmem>>, vector<1x128x128xf32>
    %207 = vector.shape_cast %206 : vector<1x128x128xf32> to vector<128x128xf32>
    %cst_141 = arith.constant dense<0.000000e+00> : vector<16x128xf32>
    %208 = tpu.matmul %205, %207, %cst_141 {dimension_numbers = #tpu.dot_dimension_numbers<[1], [0], [0], [1], [0, 0, 1, 1], [], []>} : vector<16x128xf32>, vector<128x128xf32>, vector<16x128xf32> -> vector<16x128xf32>
    %c2_142 = arith.constant 2 : index
    %c0_143 = arith.constant 0 : index
    %c0_144 = arith.constant 0 : index
    %209 = vector.load %arg14[%c2_142, %c0_143, %c0_144] : memref<3x1x128xf32, #tpu.memory_space<vmem>>, vector<1x1x128xf32>
    %210 = vector.shape_cast %209 : vector<1x1x128xf32> to vector<1x128xf32>
    %211 = vector.broadcast %210 : vector<1x128xf32> to vector<16x128xf32>
    %212 = arith.addf %208, %211 : vector<16x128xf32>
    %c0_145 = arith.constant 0 : index
    %c0_146 = arith.constant 0 : index
    %213 = vector.load %arg15[%c0_145, %c0_146] : memref<16x128xf32, #tpu.memory_space<vmem>>, vector<16x128xf32>
    tpu.vector_store %arg15[%c0_145, %c0_146], %212 {strides = array<i32>} : memref<16x128xf32, #tpu.memory_space<vmem>>, vector<16x128xf32>,
    return
  }
}

</mosaic_0001>

<llo_original>
// kernel: schnet_forward.1
$region0: #{schnet_forward.1}
  #allocation0 [shape = 'u32[]', space=smem, size = 0x4, offset = 0x4, fixed_abs, tag = 'smem constant byte address 0x4 - core index']
  #allocation1 [shape = 'u32[144,128]{1,0:T(1,128)}', space=vmem, size = 0x12000, scoped, tag = 'internal scratch']
  %s0 = inlined_call_operand.vmem [shape: f32[16,1], index: 0, kind: input, shape index: {}]
  %s1 = inlined_call_operand.vmem [shape: f32[1,128], index: 1, kind: input, shape index: {}]
  %s2 = inlined_call_operand.vmem [shape: bf16[16,16], index: 2, kind: input, shape index: {}]
  %s3 = inlined_call_operand.vmem [shape: bf16[16,16], index: 3, kind: input, shape index: {}]
  %s4 = inlined_call_operand.vmem [shape: f32[16,128], index: 4, kind: input, shape index: {}]
  %s5 = inlined_call_operand.vmem [shape: f32[3,128,128], index: 5, kind: input, shape index: {}]
  %s6 = inlined_call_operand.vmem [shape: f32[3,1,128], index: 6, kind: input, shape index: {}]
  %s7 = inlined_call_operand.vmem [shape: f32[3,128,128], index: 7, kind: input, shape index: {}]
  %s8 = inlined_call_operand.vmem [shape: f32[3,1,128], index: 8, kind: input, shape index: {}]
  %s9 = inlined_call_operand.vmem [shape: f32[3,128,128], index: 9, kind: input, shape index: {}]
  %s10 = inlined_call_operand.vmem [shape: f32[3,1,128], index: 10, kind: input, shape index: {}]
  %s11 = inlined_call_operand.vmem [shape: f32[3,128,128], index: 11, kind: input, shape index: {}]
  %s12 = inlined_call_operand.vmem [shape: f32[3,1,128], index: 12, kind: input, shape index: {}]
  %s13 = inlined_call_operand.vmem [shape: f32[3,128,128], index: 13, kind: input, shape index: {}]
  %s14 = inlined_call_operand.vmem [shape: f32[3,1,128], index: 14, kind: input, shape index: {}]
  %s15 = inlined_call_operand.vmem [shape: f32[16,128], index: 15, kind: output, shape index: {}]
  %s16 = sld [smem:[#allocation0]]
  $region70: #{schnet_forward.1} parent=0
    _
  %s18 = ssub.s32 1, %s16
  %s19 = scalar_select 0, %s18, %s16
  // Predicated region
  $region2: #{schnet_forward.1} parent=0 // pred_check
    _
  $region3: #{schnet_forward.1} parent=0 // pred_check_branch
    %21 = sbr.rel (0) target = $region5
  $region4: #{schnet_forward.1} parent=0 // pred_region
    _
  $region5: #{schnet_forward.1} parent=0 // pred_fallthru
    _
  // Predicated region
  $region6: #{schnet_forward.1} parent=0 // pred_check
    _
  $region7: #{schnet_forward.1} parent=0 // pred_check_branch
    %23 = sbr.rel (0) target = $region9
  $region8: #{schnet_forward.1} parent=0 // pred_region
    _
  $region9: #{schnet_forward.1} parent=0 // pred_fallthru
    _
  // Predicated region
  $region10: #{schnet_forward.1} parent=0 // pred_check
    _
  $region11: #{schnet_forward.1} parent=0 // pred_check_branch
    %25 = sbr.rel (0) target = $region13
  $region12: #{schnet_forward.1} parent=0 // pred_region
    _
  $region13: #{schnet_forward.1} parent=0 // pred_fallthru
    _
  // Predicated region
  $region14: #{schnet_forward.1} parent=0 // pred_check
    _
  $region15: #{schnet_forward.1} parent=0 // pred_check_branch
    %27 = sbr.rel (0) target = $region17
  $region16: #{schnet_forward.1} parent=0 // pred_region
    _
  $region17: #{schnet_forward.1} parent=0 // pred_fallthru
    _
  // Predicated region
  $region18: #{schnet_forward.1} parent=0 // pred_check
    _
  $region19: #{schnet_forward.1} parent=0 // pred_check_branch
    %29 = sbr.rel (0) target = $region21
  $region20: #{schnet_forward.1} parent=0 // pred_region
    _
  $region21: #{schnet_forward.1} parent=0 // pred_fallthru
    _
  // Predicated region
  $region22: #{schnet_forward.1} parent=0 // pred_check
    _
  $region23: #{schnet_forward.1} parent=0 // pred_check_branch
    %31 = sbr.rel (0) target = $region25
  $region24: #{schnet_forward.1} parent=0 // pred_region
    _
  $region25: #{schnet_forward.1} parent=0 // pred_fallthru
    _
  // Predicated region
  $region26: #{schnet_forward.1} parent=0 // pred_check
    _
  $region27: #{schnet_forward.1} parent=0 // pred_check_branch
    %33 = sbr.rel (0) target = $region29
  $region28: #{schnet_forward.1} parent=0 // pred_region
    _
  $region29: #{schnet_forward.1} parent=0 // pred_fallthru
    _
  // Predicated region
  $region30: #{schnet_forward.1} parent=0 // pred_check
    _
  $region31: #{schnet_forward.1} parent=0 // pred_check_branch
    %35 = sbr.rel (0) target = $region33
  $region32: #{schnet_forward.1} parent=0 // pred_region
    _
  $region33: #{schnet_forward.1} parent=0 // pred_fallthru
    _
  // Predicated region
  $region34: #{schnet_forward.1} parent=0 // pred_check
    _
  $region35: #{schnet_forward.1} parent=0 // pred_check_branch
    %37 = sbr.rel (0) target = $region37
  $region36: #{schnet_forward.1} parent=0 // pred_region
    _
  $region37: #{schnet_forward.1} parent=0 // pred_fallthru
    _
  // Predicated region
  $region38: #{schnet_forward.1} parent=0 // pred_check
    _
  $region39: #{schnet_forward.1} parent=0 // pred_check_branch
    %39 = sbr.rel (0) target = $region41
  $region40: #{schnet_forward.1} parent=0 // pred_region
    _
  $region41: #{schnet_forward.1} parent=0 // pred_fallthru
    _
  // Predicated region
  $region42: #{schnet_forward.1} parent=0 // pred_check
    _
  $region43: #{schnet_forward.1} parent=0 // pred_check_branch
    %41 = sbr.rel (0) target = $region45
  $region44: #{schnet_forward.1} parent=0 // pred_region
    _
  $region45: #{schnet_forward.1} parent=0 // pred_fallthru
    _
  // Predicated region
  $region46: #{schnet_forward.1} parent=0 // pred_check
    _
  $region47: #{schnet_forward.1} parent=0 // pred_check_branch
    %43 = sbr.rel (0) target = $region49
  $region48: #{schnet_forward.1} parent=0 // pred_region
    _
  $region49: #{schnet_forward.1} parent=0 // pred_fallthru
    _
  // Predicated region
  $region50: #{schnet_forward.1} parent=0 // pred_check
    _
  $region51: #{schnet_forward.1} parent=0 // pred_check_branch
    %45 = sbr.rel (0) target = $region53
  $region52: #{schnet_forward.1} parent=0 // pred_region
    _
  $region53: #{schnet_forward.1} parent=0 // pred_fallthru
    _
  // Predicated region
  $region54: #{schnet_forward.1} parent=0 // pred_check
    _
  $region55: #{schnet_forward.1} parent=0 // pred_check_branch
    %47 = sbr.rel (0) target = $region57
  $region56: #{schnet_forward.1} parent=0 // pred_region
    _
  $region57: #{schnet_forward.1} parent=0 // pred_fallthru
    _
  // Predicated region
  $region58: #{schnet_forward.1} parent=0 // pred_check
    _
  $region59: #{schnet_forward.1} parent=0 // pred_check_branch
    %49 = sbr.rel (0) target = $region61
  $region60: #{schnet_forward.1} parent=0 // pred_region
    _
  $region61: #{schnet_forward.1} parent=0 // pred_fallthru
    _
  %v51 = vld [vmem:[%s0] sm:$0xff]
  %v52 = vld [vmem:[%s0 + $0x8] sm:$0xff]
  %v53 = vld [vmem:[%s1] sm:$0x1]
  %55 = vset.pattern.permute.xlu0 0
  %56 = vperm.xlu0 %55, %v51
  %v57 = vpop.permute.xlu0 %56
  %60 = vset.pattern.permute.xlu0 0
  %61 = vperm.xlu0 %60, %v52
  %v62 = vpop.permute.xlu0 %61
  %v65 = vlaneseq
  %v66 = vshrl.u32 %v65, 7
  %v67 = vsub.s32 0, %v66
  %v68 = vrot.slane %v53, %v67
  %v70 = vsub.f32 %v57, %v68
  %v71 = vsub.f32 %v62, %v68
  %v72 = vmul.f32 %v70, -5.0
  %v73 = vmul.f32 %v71, -5.0
  %v74 = vmul.f32 %v72, %v70
  %v75 = vmul.f32 %v73, %v71
  %v76 = vmul.f32 %v74, 1.442695
  %v77 = vpow.pop %v76
  %v78 = vmul.f32 %v75, 1.442695
  %v79 = vpow.pop %v78
  %v80 = vld [vmem:[%s2] sm:$0xf]
  %v81 = vld [vmem:[%s2 + $0x4] sm:$0xf]
  %v82 = vld [vmem:[%s3] sm:$0xf]
  %v83 = vld [vmem:[%s3 + $0x4] sm:$0xf]
  %v84 = vld [vmem:[%s4] sm:$0xff]
  %v85 = vld [vmem:[%s4 + $0x8] sm:$0xff]
  %v86 = vld [vmem:[%s5] sm:$0xff]
  %v87 = vld [vmem:[%s5 + $0x8] sm:$0xff]
  %v88 = vld [vmem:[%s5 + $0x10] sm:$0xff]
  %v89 = vld [vmem:[%s5 + $0x18] sm:$0xff]
  %v90 = vld [vmem:[%s5 + $0x20] sm:$0xff]
  %v91 = vld [vmem:[%s5 + $0x28] sm:$0xff]
  %v92 = vld [vmem:[%s5 + $0x30] sm:$0xff]
  %v93 = vld [vmem:[%s5 + $0x38] sm:$0xff]
  %v94 = vld [vmem:[%s5 + $0x40] sm:$0xff]
  %v95 = vld [vmem:[%s5 + $0x48] sm:$0xff]
  %v96 = vld [vmem:[%s5 + $0x50] sm:$0xff]
  %v97 = vld [vmem:[%s5 + $0x58] sm:$0xff]
  %v98 = vld [vmem:[%s5 + $0x60] sm:$0xff]
  %v99 = vld [vmem:[%s5 + $0x68] sm:$0xff]
  %v100 = vld [vmem:[%s5 + $0x70] sm:$0xff]
  %v101 = vld [vmem:[%s5 + $0x78] sm:$0xff]
  %v102 = vld [vmem:[%s6] sm:$0x1]
  %v104 = vlaneseq
  %v105 = vshrl.u32 %v104, 7
  %v106 = vsub.s32 0, %v105
  %v107 = vrot.slane %v102, %v106
  %109 = vmatprep.subr.mxu0 0.0
  %110 = vmatpush1.msra.mxu0 %v101
  %111 = vmatprep.subr.mxu0 0.0
  %112 = vmatpush1.msra.mxu0 %v100
  %113 = vmatprep.subr.mxu0 0.0
  %114 = vmatpush1.msra.mxu0 %v99
  %115 = vmatprep.subr.mxu0 0.0
  %116 = vmatpush1.msra.mxu0 %v98
  %117 = vmatprep.subr.mxu0 0.0
  %118 = vmatpush1.msra.mxu0 %v97
  %119 = vmatprep.subr.mxu0 0.0
  %120 = vmatpush1.msra.mxu0 %v96
  %121 = vmatprep.subr.mxu0 0.0
  %122 = vmatpush1.msra.mxu0 %v95
  %123 = vmatprep.subr.mxu0 0.0
  %124 = vmatpush1.msra.mxu0 %v94
  %125 = vmatprep.subr.mxu0 0.0
  %126 = vmatpush1.msra.mxu0 %v93
  %127 = vmatprep.subr.mxu0 0.0
  %128 = vmatpush1.msra.mxu0 %v92
  %129 = vmatprep.subr.mxu0 0.0
  %130 = vmatpush1.msra.mxu0 %v91
  %131 = vmatprep.subr.mxu0 0.0
  %132 = vmatpush1.msra.mxu0 %v90
  %133 = vmatprep.subr.mxu0 0.0
  %134 = vmatpush1.msra.mxu0 %v89
  %135 = vmatprep.subr.mxu0 0.0
  %136 = vmatpush1.msra.mxu0 %v88
  %137 = vmatprep.subr.mxu0 0.0
  %138 = vmatpush1.msra.mxu0 %v87
  %139 = vmatprep.subr.mxu0 0.0
  %140 = vmatpush1.msra.mxu0 %v86
  %141 = vmatprep.subr.mxu0 0.0
  %142 = vmatpush2.msra.mxu0 0.0
  %143 = vmatprep.subr.mxu0 0.0
  %144 = vmatpush2.msra.mxu0 0.0
  %145 = vmatprep.subr.mxu0 0.0
  %146 = vmatpush2.msra.mxu0 0.0
  %147 = vmatprep.subr.mxu0 0.0
  %148 = vmatpush2.msra.mxu0 0.0
  %149 = vmatprep.subr.mxu0 0.0
  %150 = vmatpush2.msra.mxu0 0.0
  %151 = vmatprep.subr.mxu0 0.0
  %152 = vmatpush2.msra.mxu0 0.0
  %153 = vmatprep.subr.mxu0 0.0
  %154 = vmatpush2.msra.mxu0 0.0
  %155 = vmatprep.subr.mxu0 0.0
  %156 = vmatpush2.msra.mxu0 0.0
  %157 = vmatprep.subr.mxu0 0.0
  %158 = vmatpush2.msra.mxu0 0.0
  %159 = vmatprep.subr.mxu0 0.0
  %160 = vmatpush2.msra.mxu0 0.0
  %161 = vmatprep.subr.mxu0 0.0
  %162 = vmatpush2.msra.mxu0 0.0
  %163 = vmatprep.subr.mxu0 0.0
  %164 = vmatpush2.msra.mxu0 0.0
  %165 = vmatprep.subr.mxu0 0.0
  %166 = vmatpush2.msra.mxu0 0.0
  %167 = vmatprep.subr.mxu0 0.0
  %168 = vmatpush2.msra.mxu0 0.0
  %169 = vmatprep.subr.mxu0 0.0
  %170 = vmatpush2.msra.mxu0 0.0
  %171 = vmatprep.subr.mxu0 0.0
  %172 = vmatpush2.msra.mxu0 0.0
  %173 = vmatprep.mubr.f32.mxu0 0.0
  %174 = vmatmul.mubr.f32.gmra.mxu0 %v84
  %v175 = vpop.f32.mrf.mxu0
  %v176 = vadd.f32 %v107, %v175
  %v177 = vpop.f32.mrf.mxu0
  %178 = vmatprep.mubr.f32.mxu0 0.0
  %179 = vmatmul.mubr.f32.gmra.mxu0 %v85
  %v180 = vpop.f32.mrf.mxu0
  %v181 = vadd.f32 %v107, %v180
  %v182 = vpop.f32.mrf.mxu0
  %183 = vdwg.mxu0
  %v184 = vld [vmem:[%s7] sm:$0xff]
  %v185 = vld [vmem:[%s7 + $0x8] sm:$0xff]
  %v186 = vld [vmem:[%s7 + $0x10] sm:$0xff]
  %v187 = vld [vmem:[%s7 + $0x18] sm:$0xff]
  %v188 = vld [vmem:[%s7 + $0x20] sm:$0xff]
  %v189 = vld [vmem:[%s7 + $0x28] sm:$0xff]
  %v190 = vld [vmem:[%s7 + $0x30] sm:$0xff]
  %v191 = vld [vmem:[%s7 + $0x38] sm:$0xff]
  %v192 = vld [vmem:[%s7 + $0x40] sm:$0xff]
  %v193 = vld [vmem:[%s7 + $0x48] sm:$0xff]
  %v194 = vld [vmem:[%s7 + $0x50] sm:$0xff]
  %v195 = vld [vmem:[%s7 + $0x58] sm:$0xff]
  %v196 = vld [vmem:[%s7 + $0x60] sm:$0xff]
  %v197 = vld [vmem:[%s7 + $0x68] sm:$0xff]
  %v198 = vld [vmem:[%s7 + $0x70] sm:$0xff]
  %v199 = vld [vmem:[%s7 + $0x78] sm:$0xff]
  %v200 = vld [vmem:[%s8] sm:$0x1]
  %v202 = vlaneseq
  %v203 = vshrl.u32 %v202, 7
  %v204 = vsub.s32 0, %v203
  %v205 = vrot.slane %v200, %v204
  %207 = vmatprep.subr.mxu0 0.0
  %208 = vmatpush1.msra.mxu0 %v199
  %209 = vmatprep.subr.mxu0 0.0
  %210 = vmatpush1.msra.mxu0 %v198
  %211 = vmatprep.subr.mxu0 0.0
  %212 = vmatpush1.msra.mxu0 %v197
  %213 = vmatprep.subr.mxu0 0.0
  %214 = vmatpush1.msra.mxu0 %v196
  %215 = vmatprep.subr.mxu0 0.0
  %216 = vmatpush1.msra.mxu0 %v195
  %217 = vmatprep.subr.mxu0 0.0
  %218 = vmatpush1.msra.mxu0 %v194
  %219 = vmatprep.subr.mxu0 0.0
  %220 = vmatpush1.msra.mxu0 %v193
  %221 = vmatprep.subr.mxu0 0.0
  %222 = vmatpush1.msra.mxu0 %v192
  %223 = vmatprep.subr.mxu0 0.0
  %224 = vmatpush1.msra.mxu0 %v191
  %225 = vmatprep.subr.mxu0 0.0
  %226 = vmatpush1.msra.mxu0 %v190
  %227 = vmatprep.subr.mxu0 0.0
  %228 = vmatpush1.msra.mxu0 %v189
  %229 = vmatprep.subr.mxu0 0.0
  %230 = vmatpush1.msra.mxu0 %v188
  %231 = vmatprep.subr.mxu0 0.0
  %232 = vmatpush1.msra.mxu0 %v187
  %233 = vmatprep.subr.mxu0 0.0
  %234 = vmatpush1.msra.mxu0 %v186
  %235 = vmatprep.subr.mxu0 0.0
  %236 = vmatpush1.msra.mxu0 %v185
  %237 = vmatprep.subr.mxu0 0.0
  %238 = vmatpush1.msra.mxu0 %v184
  %239 = vmatprep.subr.mxu0 0.0
  %240 = vmatpush2.msra.mxu0 0.0
  %241 = vmatprep.subr.mxu0 0.0
  %242 = vmatpush2.msra.mxu0 0.0
  %243 = vmatprep.subr.mxu0 0.0
  %244 = vmatpush2.msra.mxu0 0.0
  %245 = vmatprep.subr.mxu0 0.0
  %246 = vmatpush2.msra.mxu0 0.0
  %247 = vmatprep.subr.mxu0 0.0
  %248 = vmatpush2.msra.mxu0 0.0
  %249 = vmatprep.subr.mxu0 0.0
  %250 = vmatpush2.msra.mxu0 0.0
  %251 = vmatprep.subr.mxu0 0.0
  %252 = vmatpush2.msra.mxu0 0.0
  %253 = vmatprep.subr.mxu0 0.0
  %254 = vmatpush2.msra.mxu0 0.0
  %255 = vmatprep.subr.mxu0 0.0
  %256 = vmatpush2.msra.mxu0 0.0
  %257 = vmatprep.subr.mxu0 0.0
  %258 = vmatpush2.msra.mxu0 0.0
  %259 = vmatprep.subr.mxu0 0.0
  %260 = vmatpush2.msra.mxu0 0.0
  %261 = vmatprep.subr.mxu0 0.0
  %262 = vmatpush2.msra.mxu0 0.0
  %263 = vmatprep.subr.mxu0 0.0
  %264 = vmatpush2.msra.mxu0 0.0
  %265 = vmatprep.subr.mxu0 0.0
  %266 = vmatpush2.msra.mxu0 0.0
  %267 = vmatprep.subr.mxu0 0.0
  %268 = vmatpush2.msra.mxu0 0.0
  %269 = vmatprep.subr.mxu0 0.0
  %270 = vmatpush2.msra.mxu0 0.0
  %271 = vmatprep.mubr.f32.mxu0 0.0
  %272 = vmatmul.mubr.f32.gmra.mxu0 %v77
  %v273 = vpop.f32.mrf.mxu0
  %v274 = vadd.f32 %v205, %v273
  %v275 = vpop.f32.mrf.mxu0
  %276 = vmatprep.mubr.f32.mxu0 0.0
  %277 = vmatmul.mubr.f32.gmra.mxu0 %v79
  %v278 = vpop.f32.mrf.mxu0
  %v279 = vadd.f32 %v205, %v278
  %v280 = vpop.f32.mrf.mxu0
  %281 = vdwg.mxu0
  %vm282 = vcmp.gt.f32.partialorder %v274, 20.0
  %vm283 = vcmp.gt.f32.partialorder %v279, 20.0
  %v284 = vmin.f32 %v274, 20.0
  %v285 = vmin.f32 %v279, 20.0
  %v286 = vmul.f32 %v284, 1.442695
  %v287 = vpow.pop %v286
  %v288 = vmul.f32 %v285, 1.442695
  %v289 = vpow.pop %v288
  %v290 = vadd.f32 %v287, 1.0
  %v291 = vlog2.pop %v290
  %v292 = vmul.f32 %v291, 0.6931472
  %v293 = vmul.f32 -0.5, %v287
  %v294 = vadd.f32 %v293, 1.0
  %v295 = vmul.f32 %v294, %v287
  %v296 = vand.u32 2147483647, %v287
  %vm297 = vcmp.lt.f32.partialorder %v296, 0.0004427343
  %v298 = vsel %vm297, %v295, %v292
  %v299 = vadd.f32 %v289, 1.0
  %v300 = vlog2.pop %v299
  %v301 = vmul.f32 %v300, 0.6931472
  %v302 = vmul.f32 -0.5, %v289
  %v303 = vadd.f32 %v302, 1.0
  %v304 = vmul.f32 %v303, %v289
  %v305 = vand.u32 2147483647, %v289
  %vm306 = vcmp.lt.f32.partialorder %v305, 0.0004427343
  %v307 = vsel %vm306, %v304, %v301
  %v308 = vsel %vm282, %v274, %v298
  %v309 = vsel %vm283, %v279, %v307
  %v310 = vsub.f32 %v308, 0.6931472
  %v311 = vsub.f32 %v309, 0.6931472
  %v312 = vld [vmem:[%s9] sm:$0xff]
  %v313 = vld [vmem:[%s9 + $0x8] sm:$0xff]
  %v314 = vld [vmem:[%s9 + $0x10] sm:$0xff]
  %v315 = vld [vmem:[%s9 + $0x18] sm:$0xff]
  %v316 = vld [vmem:[%s9 + $0x20] sm:$0xff]
  %v317 = vld [vmem:[%s9 + $0x28] sm:$0xff]
  %v318 = vld [vmem:[%s9 + $0x30] sm:$0xff]
  %v319 = vld [vmem:[%s9 + $0x38] sm:$0xff]
  %v320 = vld [vmem:[%s9 + $0x40] sm:$0xff]
  %v321 = vld [vmem:[%s9 + $0x48] sm:$0xff]
  %v322 = vld [vmem:[%s9 + $0x50] sm:$0xff]
  %v323 = vld [vmem:[%s9 + $0x58] sm:$0xff]
  %v324 = vld [vmem:[%s9 + $0x60] sm:$0xff]
  %v325 = vld [vmem:[%s9 + $0x68] sm:$0xff]
  %v326 = vld [vmem:[%s9 + $0x70] sm:$0xff]
  %v327 = vld [vmem:[%s9 + $0x78] sm:$0xff]
  %v328 = vld [vmem:[%s10] sm:$0x1]
  %v330 = vlaneseq
  %v331 = vshrl.u32 %v330, 7
  %v332 = vsub.s32 0, %v331
  %v333 = vrot.slane %v328, %v332
  %335 = vmatprep.subr.mxu0 0.0
  %336 = vmatpush1.msra.mxu0 %v327
  %337 = vmatprep.subr.mxu0 0.0
  %338 = vmatpush1.msra.mxu0 %v326
  %339 = vmatprep.subr.mxu0 0.0
  %340 = vmatpush1.msra.mxu0 %v325
  %341 = vmatprep.subr.mxu0 0.0
  %342 = vmatpush1.msra.mxu0 %v324
  %343 = vmatprep.subr.mxu0 0.0
  %344 = vmatpush1.msra.mxu0 %v323
  %345 = vmatprep.subr.mxu0 0.0
  %346 = vmatpush1.msra.mxu0 %v322
  %347 = vmatprep.subr.mxu0 0.0
  %348 = vmatpush1.msra.mxu0 %v321
  %349 = vmatprep.subr.mxu0 0.0
  %350 = vmatpush1.msra.mxu0 %v320
  %351 = vmatprep.subr.mxu0 0.0
  %352 = vmatpush1.msra.mxu0 %v319
  %353 = vmatprep.subr.mxu0 0.0
  %354 = vmatpush1.msra.mxu0 %v318
  %355 = vmatprep.subr.mxu0 0.0
  %356 = vmatpush1.msra.mxu0 %v317
  %357 = vmatprep.subr.mxu0 0.0
  %358 = vmatpush1.msra.mxu0 %v316
  %359 = vmatprep.subr.mxu0 0.0
  %360 = vmatpush1.msra.mxu0 %v315
  %361 = vmatprep.subr.mxu0 0.0
  %362 = vmatpush1.msra.mxu0 %v314
  %363 = vmatprep.subr.mxu0 0.0
  %364 = vmatpush1.msra.mxu0 %v313
  %365 = vmatprep.subr.mxu0 0.0
  %366 = vmatpush1.msra.mxu0 %v312
  %367 = vmatprep.subr.mxu0 0.0
  %368 = vmatpush2.msra.mxu0 0.0
  %369 = vmatprep.subr.mxu0 0.0
  %370 = vmatpush2.msra.mxu0 0.0
  %371 = vmatprep.subr.mxu0 0.0
  %372 = vmatpush2.msra.mxu0 0.0
  %373 = vmatprep.subr.mxu0 0.0
  %374 = vmatpush2.msra.mxu0 0.0
  %375 = vmatprep.subr.mxu0 0.0
  %376 = vmatpush2.msra.mxu0 0.0
  %377 = vmatprep.subr.mxu0 0.0
  %378 = vmatpush2.msra.mxu0 0.0
  %379 = vmatprep.subr.mxu0 0.0
  %380 = vmatpush2.msra.mxu0 0.0
  %381 = vmatprep.subr.mxu0 0.0
  %382 = vmatpush2.msra.mxu0 0.0
  %383 = vmatprep.subr.mxu0 0.0
  %384 = vmatpush2.msra.mxu0 0.0
  %385 = vmatprep.subr.mxu0 0.0
  %386 = vmatpush2.msra.mxu0 0.0
  %387 = vmatprep.subr.mxu0 0.0
  %388 = vmatpush2.msra.mxu0 0.0
  %389 = vmatprep.subr.mxu0 0.0
  %390 = vmatpush2.msra.mxu0 0.0
  %391 = vmatprep.subr.mxu0 0.0
  %392 = vmatpush2.msra.mxu0 0.0
  %393 = vmatprep.subr.mxu0 0.0
  %394 = vmatpush2.msra.mxu0 0.0
  %395 = vmatprep.subr.mxu0 0.0
  %396 = vmatpush2.msra.mxu0 0.0
  %397 = vmatprep.subr.mxu0 0.0
  %398 = vmatpush2.msra.mxu0 0.0
  %399 = vmatprep.mubr.f32.mxu0 0.0
  %400 = vmatmul.mubr.f32.gmra.mxu0 %v310
  %v401 = vpop.f32.mrf.mxu0
  %v402 = vadd.f32 %v333, %v401
  %v403 = vpop.f32.mrf.mxu0
  %404 = vmatprep.mubr.f32.mxu0 0.0
  %405 = vmatmul.mubr.f32.gmra.mxu0 %v311
  %v406 = vpop.f32.mrf.mxu0
  %v407 = vadd.f32 %v333, %v406
  %v408 = vpop.f32.mrf.mxu0
  %409 = vdwg.mxu0
  %vm410 = vcmp.gt.f32.partialorder %v402, 20.0
  %vm411 = vcmp.gt.f32.partialorder %v407, 20.0
  %v412 = vmin.f32 %v402, 20.0
  %v413 = vmin.f32 %v407, 20.0
  %v414 = vmul.f32 %v412, 1.442695
  %v415 = vpow.pop %v414
  %v416 = vmul.f32 %v413, 1.442695
  %v417 = vpow.pop %v416
  %v418 = vadd.f32 %v415, 1.0
  %v419 = vlog2.pop %v418
  %v420 = vmul.f32 %v419, 0.6931472
  %v421 = vmul.f32 -0.5, %v415
  %v422 = vadd.f32 %v421, 1.0
  %v423 = vmul.f32 %v422, %v415
  %v424 = vand.u32 2147483647, %v415
  %vm425 = vcmp.lt.f32.partialorder %v424, 0.0004427343
  %v426 = vsel %vm425, %v423, %v420
  %v427 = vadd.f32 %v417, 1.0
  %v428 = vlog2.pop %v427
  %v429 = vmul.f32 %v428, 0.6931472
  %v430 = vmul.f32 -0.5, %v417
  %v431 = vadd.f32 %v430, 1.0
  %v432 = vmul.f32 %v431, %v417
  %v433 = vand.u32 2147483647, %v417
  %vm434 = vcmp.lt.f32.partialorder %v433, 0.0004427343
  %v435 = vsel %vm434, %v432, %v429
  %v436 = vsel %vm410, %v402, %v426
  %v437 = vsel %vm411, %v407, %v435
  %v438 = vsub.f32 %v436, 0.6931472
  %v439 = vsub.f32 %v437, 0.6931472
  %v440 = vpack.c.bf16 %v181, %v176
  %v443 = vunpack.c.l.b16 %v80
  %v444 = vunpack.c.l.b16 %v81
  %v445 = vpack.c.b16 %v444, %v443
  %vm446 = vcmask 130048
  %v448 = vsel %vm446, %v445, 0
  %450 = vmatprep.subr.bf16.mxu0 0
  %451 = vmatpush1.bf16.msra.mxu0 0
  %452 = vmatprep.subr.bf16.mxu0 0
  %453 = vmatpush1.bf16.msra.mxu0 0
  %454 = vmatprep.subr.bf16.mxu0 0
  %455 = vmatpush1.bf16.msra.mxu0 0
  %456 = vmatprep.subr.bf16.mxu0 0
  %457 = vmatpush1.bf16.msra.mxu0 0
  %458 = vmatprep.subr.bf16.mxu0 0
  %459 = vmatpush1.bf16.msra.mxu0 0
  %460 = vmatprep.subr.bf16.mxu0 0
  %461 = vmatpush1.bf16.msra.mxu0 0
  %462 = vmatprep.subr.bf16.mxu0 0
  %463 = vmatpush1.bf16.msra.mxu0 0
  %464 = vmatprep.subr.bf16.mxu0 0
  %465 = vmatpush1.bf16.msra.mxu0 %v440
  %466 = vmatprep.subr.bf16.mxu0 0
  %467 = vmatpush2.bf16.msra.mxu0 0
  %468 = vmatprep.subr.bf16.mxu0 0
  %469 = vmatpush2.bf16.msra.mxu0 0
  %470 = vmatprep.subr.bf16.mxu0 0
  %471 = vmatpush2.bf16.msra.mxu0 0
  %472 = vmatprep.subr.bf16.mxu0 0
  %473 = vmatpush2.bf16.msra.mxu0 0
  %474 = vmatprep.subr.bf16.mxu0 0
  %475 = vmatpush2.bf16.msra.mxu0 0
  %476 = vmatprep.subr.bf16.mxu0 0
  %477 = vmatpush2.bf16.msra.mxu0 0
  %478 = vmatprep.subr.bf16.mxu0 0
  %479 = vmatpush2.bf16.msra.mxu0 0
  %480 = vmatprep.subr.bf16.mxu0 0
  %481 = vmatpush2.bf16.msra.mxu0 0
  %482 = vmatprep.mubr.bf16.mxu0 0
  %483 = vmatmul.mubr.bf16.gmra.mxu0 %v448
  %v484 = vpop.f32.mrf.mxu0
  %v485 = vadd.f32 0.0, %v484
  %v486 = vpop.f32.mrf.mxu0
  %v487 = vpop.f32.mrf.mxu0
  %v488 = vadd.f32 0.0, %v487
  %v489 = vpop.f32.mrf.mxu0
  %490 = vdwg.mxu0
  %v491 = vmul.f32 %v485, %v438
  %v492 = vmul.f32 %v488, %v439
  %v493 = vpack.c.bf16 %v492, %v491
  %v496 = vunpack.c.l.b16 %v82
  %v497 = vunpack.c.l.b16 %v83
  %v498 = vpack.c.b16 %v497, %v496
  %v500 = vsel %vm446, %v498, 0
  %502 = vmatprep.subr.bf16.mxu0 0
  %503 = vmatpush1.bf16.msra.mxu0 0
  %504 = vmatprep.subr.bf16.mxu0 0
  %505 = vmatpush1.bf16.msra.mxu0 0
  %506 = vmatprep.subr.bf16.mxu0 0
  %507 = vmatpush1.bf16.msra.mxu0 0
  %508 = vmatprep.subr.bf16.mxu0 0
  %509 = vmatpush1.bf16.msra.mxu0 0
  %510 = vmatprep.subr.bf16.mxu0 0
  %511 = vmatpush1.bf16.msra.mxu0 0
  %512 = vmatprep.subr.bf16.mxu0 0
  %513 = vmatpush1.bf16.msra.mxu0 0
  %514 = vmatprep.subr.bf16.mxu0 0
  %515 = vmatpush1.bf16.msra.mxu0 0
  %516 = vmatprep.subr.bf16.mxu0 0
  %517 = vmatpush1.bf16.msra.mxu0 %v493
  %518 = vmatprep.subr.bf16.mxu0 0
  %519 = vmatpush2.bf16.msra.mxu0 0
  %520 = vmatprep.subr.bf16.mxu0 0
  %521 = vmatpush2.bf16.msra.mxu0 0
  %522 = vmatprep.subr.bf16.mxu0 0
  %523 = vmatpush2.bf16.msra.mxu0 0
  %524 = vmatprep.subr.bf16.mxu0 0
  %525 = vmatpush2.bf16.msra.mxu0 0
  %526 = vmatprep.subr.bf16.mxu0 0
  %527 = vmatpush2.bf16.msra.mxu0 0
  %528 = vmatprep.subr.bf16.mxu0 0
  %529 = vmatpush2.bf16.msra.mxu0 0
  %530 = vmatprep.subr.bf16.mxu0 0
  %531 = vmatpush2.bf16.msra.mxu0 0
  %532 = vmatprep.subr.bf16.mxu0 0
  %533 = vmatpush2.bf16.msra.mxu0 0
  %534 = vmatprep.mubr.bf16.mxu0 0
  %535 = vmatmul.mubr.bf16.gmra.mxu0 %v500
  %v536 = vpop.f32.mrf.mxu0
  %v537 = vadd.f32 0.0, %v536
  %v538 = vpop.f32.mrf.mxu0
  %v539 = vpop.f32.mrf.mxu0
  %v540 = vadd.f32 0.0, %v539
  %v541 = vpop.f32.mrf.mxu0
  %542 = vdwg.mxu0
  %v543 = vld [vmem:[%s11] sm:$0xff]
  %v544 = vld [vmem:[%s11 + $0x8] sm:$0xff]
  %v545 = vld [vmem:[%s11 + $0x10] sm:$0xff]
  %v546 = vld [vmem:[%s11 + $0x18] sm:$0xff]
  %v547 = vld [vmem:[%s11 + $0x20] sm:$0xff]
  %v548 = vld [vmem:[%s11 + $0x28] sm:$0xff]
  %v549 = vld [vmem:[%s11 + $0x30] sm:$0xff]
  %v550 = vld [vmem:[%s11 + $0x38] sm:$0xff]
  %v551 = vld [vmem:[%s11 + $0x40] sm:$0xff]
  %v552 = vld [vmem:[%s11 + $0x48] sm:$0xff]
  %v553 = vld [vmem:[%s11 + $0x50] sm:$0xff]
  %v554 = vld [vmem:[%s11 + $0x58] sm:$0xff]
  %v555 = vld [vmem:[%s11 + $0x60] sm:$0xff]
  %v556 = vld [vmem:[%s11 + $0x68] sm:$0xff]
  %v557 = vld [vmem:[%s11 + $0x70] sm:$0xff]
  %v558 = vld [vmem:[%s11 + $0x78] sm:$0xff]
  %v559 = vld [vmem:[%s12] sm:$0x1]
  %v561 = vlaneseq
  %v562 = vshrl.u32 %v561, 7
  %v563 = vsub.s32 0, %v562
  %v564 = vrot.slane %v559, %v563
  %566 = vmatprep.subr.mxu0 0.0
  %567 = vmatpush1.msra.mxu0 %v558
  %568 = vmatprep.subr.mxu0 0.0
  %569 = vmatpush1.msra.mxu0 %v557
  %570 = vmatprep.subr.mxu0 0.0
  %571 = vmatpush1.msra.mxu0 %v556
  %572 = vmatprep.subr.mxu0 0.0
  %573 = vmatpush1.msra.mxu0 %v555
  %574 = vmatprep.subr.mxu0 0.0
  %575 = vmatpush1.msra.mxu0 %v554
  %576 = vmatprep.subr.mxu0 0.0
  %577 = vmatpush1.msra.mxu0 %v553
  %578 = vmatprep.subr.mxu0 0.0
  %579 = vmatpush1.msra.mxu0 %v552
  %580 = vmatprep.subr.mxu0 0.0
  %581 = vmatpush1.msra.mxu0 %v551
  %582 = vmatprep.subr.mxu0 0.0
  %583 = vmatpush1.msra.mxu0 %v550
  %584 = vmatprep.subr.mxu0 0.0
  %585 = vmatpush1.msra.mxu0 %v549
  %586 = vmatprep.subr.mxu0 0.0
  %587 = vmatpush1.msra.mxu0 %v548
  %588 = vmatprep.subr.mxu0 0.0
  %589 = vmatpush1.msra.mxu0 %v547
  %590 = vmatprep.subr.mxu0 0.0
  %591 = vmatpush1.msra.mxu0 %v546
  %592 = vmatprep.subr.mxu0 0.0
  %593 = vmatpush1.msra.mxu0 %v545
  %594 = vmatprep.subr.mxu0 0.0
  %595 = vmatpush1.msra.mxu0 %v544
  %596 = vmatprep.subr.mxu0 0.0
  %597 = vmatpush1.msra.mxu0 %v543
  %598 = vmatprep.subr.mxu0 0.0
  %599 = vmatpush2.msra.mxu0 0.0
  %600 = vmatprep.subr.mxu0 0.0
  %601 = vmatpush2.msra.mxu0 0.0
  %602 = vmatprep.subr.mxu0 0.0
  %603 = vmatpush2.msra.mxu0 0.0
  %604 = vmatprep.subr.mxu0 0.0
  %605 = vmatpush2.msra.mxu0 0.0
  %606 = vmatprep.subr.mxu0 0.0
  %607 = vmatpush2.msra.mxu0 0.0
  %608 = vmatprep.subr.mxu0 0.0
  %609 = vmatpush2.msra.mxu0 0.0
  %610 = vmatprep.subr.mxu0 0.0
  %611 = vmatpush2.msra.mxu0 0.0
  %612 = vmatprep.subr.mxu0 0.0
  %613 = vmatpush2.msra.mxu0 0.0
  %614 = vmatprep.subr.mxu0 0.0
  %615 = vmatpush2.msra.mxu0 0.0
  %616 = vmatprep.subr.mxu0 0.0
  %617 = vmatpush2.msra.mxu0 0.0
  %618 = vmatprep.subr.mxu0 0.0
  %619 = vmatpush2.msra.mxu0 0.0
  %620 = vmatprep.subr.mxu0 0.0
  %621 = vmatpush2.msra.mxu0 0.0
  %622 = vmatprep.subr.mxu0 0.0
  %623 = vmatpush2.msra.mxu0 0.0
  %624 = vmatprep.subr.mxu0 0.0
  %625 = vmatpush2.msra.mxu0 0.0
  %626 = vmatprep.subr.mxu0 0.0
  %627 = vmatpush2.msra.mxu0 0.0
  %628 = vmatprep.subr.mxu0 0.0
  %629 = vmatpush2.msra.mxu0 0.0
  %630 = vmatprep.mubr.f32.mxu0 0.0
  %631 = vmatmul.mubr.f32.gmra.mxu0 %v537
  %v632 = vpop.f32.mrf.mxu0
  %v633 = vadd.f32 %v564, %v632
  %v634 = vpop.f32.mrf.mxu0
  %635 = vmatprep.mubr.f32.mxu0 0.0
  %636 = vmatmul.mubr.f32.gmra.mxu0 %v540
  %v637 = vpop.f32.mrf.mxu0
  %v638 = vadd.f32 %v564, %v637
  %v639 = vpop.f32.mrf.mxu0
  %640 = vdwg.mxu0
  %vm641 = vcmp.gt.f32.partialorder %v633, 20.0
  %vm642 = vcmp.gt.f32.partialorder %v638, 20.0
  %v643 = vmin.f32 %v633, 20.0
  %v644 = vmin.f32 %v638, 20.0
  %v645 = vmul.f32 %v643, 1.442695
  %v646 = vpow.pop %v645
  %v647 = vmul.f32 %v644, 1.442695
  %v648 = vpow.pop %v647
  %v649 = vadd.f32 %v646, 1.0
  %v650 = vlog2.pop %v649
  %v651 = vmul.f32 %v650, 0.6931472
  %v652 = vmul.f32 -0.5, %v646
  %v653 = vadd.f32 %v652, 1.0
  %v654 = vmul.f32 %v653, %v646
  %v655 = vand.u32 2147483647, %v646
  %vm656 = vcmp.lt.f32.partialorder %v655, 0.0004427343
  %v657 = vsel %vm656, %v654, %v651
  %v658 = vadd.f32 %v648, 1.0
  %v659 = vlog2.pop %v658
  %v660 = vmul.f32 %v659, 0.6931472
  %v661 = vmul.f32 -0.5, %v648
  %v662 = vadd.f32 %v661, 1.0
  %v663 = vmul.f32 %v662, %v648
  %v664 = vand.u32 2147483647, %v648
  %vm665 = vcmp.lt.f32.partialorder %v664, 0.0004427343
  %v666 = vsel %vm665, %v663, %v660
  %v667 = vsel %vm641, %v633, %v657
  %v668 = vsel %vm642, %v638, %v666
  %v669 = vsub.f32 %v667, 0.6931472
  %v670 = vsub.f32 %v668, 0.6931472
  %v671 = vld [vmem:[%s13] sm:$0xff]
  %v672 = vld [vmem:[%s13 + $0x8] sm:$0xff]
  %v673 = vld [vmem:[%s13 + $0x10] sm:$0xff]
  %v674 = vld [vmem:[%s13 + $0x18] sm:$0xff]
  %v675 = vld [vmem:[%s13 + $0x20] sm:$0xff]
  %v676 = vld [vmem:[%s13 + $0x28] sm:$0xff]
  %v677 = vld [vmem:[%s13 + $0x30] sm:$0xff]
  %v678 = vld [vmem:[%s13 + $0x38] sm:$0xff]
  %v679 = vld [vmem:[%s13 + $0x40] sm:$0xff]
  %v680 = vld [vmem:[%s13 + $0x48] sm:$0xff]
  %v681 = vld [vmem:[%s13 + $0x50] sm:$0xff]
  %v682 = vld [vmem:[%s13 + $0x58] sm:$0xff]
  %v683 = vld [vmem:[%s13 + $0x60] sm:$0xff]
  %v684 = vld [vmem:[%s13 + $0x68] sm:$0xff]
  %v685 = vld [vmem:[%s13 + $0x70] sm:$0xff]
  %v686 = vld [vmem:[%s13 + $0x78] sm:$0xff]
  %v687 = vld [vmem:[%s14] sm:$0x1]
  %v689 = vlaneseq
  %v690 = vshrl.u32 %v689, 7
  %v691 = vsub.s32 0, %v690
  %v692 = vrot.slane %v687, %v691
  %694 = vmatprep.subr.mxu0 0.0
  %695 = vmatpush1.msra.mxu0 %v686
  %696 = vmatprep.subr.mxu0 0.0
  %697 = vmatpush1.msra.mxu0 %v685
  %698 = vmatprep.subr.mxu0 0.0
  %699 = vmatpush1.msra.mxu0 %v684
  %700 = vmatprep.subr.mxu0 0.0
  %701 = vmatpush1.msra.mxu0 %v683
  %702 = vmatprep.subr.mxu0 0.0
  %703 = vmatpush1.msra.mxu0 %v682
  %704 = vmatprep.subr.mxu0 0.0
  %705 = vmatpush1.msra.mxu0 %v681
  %706 = vmatprep.subr.mxu0 0.0
  %707 = vmatpush1.msra.mxu0 %v680
  %708 = vmatprep.subr.mxu0 0.0
  %709 = vmatpush1.msra.mxu0 %v679
  %710 = vmatprep.subr.mxu0 0.0
  %711 = vmatpush1.msra.mxu0 %v678
  %712 = vmatprep.subr.mxu0 0.0
  %713 = vmatpush1.msra.mxu0 %v677
  %714 = vmatprep.subr.mxu0 0.0
  %715 = vmatpush1.msra.mxu0 %v676
  %716 = vmatprep.subr.mxu0 0.0
  %717 = vmatpush1.msra.mxu0 %v675
  %718 = vmatprep.subr.mxu0 0.0
  %719 = vmatpush1.msra.mxu0 %v674
  %720 = vmatprep.subr.mxu0 0.0
  %721 = vmatpush1.msra.mxu0 %v673
  %722 = vmatprep.subr.mxu0 0.0
  %723 = vmatpush1.msra.mxu0 %v672
  %724 = vmatprep.subr.mxu0 0.0
  %725 = vmatpush1.msra.mxu0 %v671
  %726 = vmatprep.subr.mxu0 0.0
  %727 = vmatpush2.msra.mxu0 0.0
  %728 = vmatprep.subr.mxu0 0.0
  %729 = vmatpush2.msra.mxu0 0.0
  %730 = vmatprep.subr.mxu0 0.0
  %731 = vmatpush2.msra.mxu0 0.0
  %732 = vmatprep.subr.mxu0 0.0
  %733 = vmatpush2.msra.mxu0 0.0
  %734 = vmatprep.subr.mxu0 0.0
  %735 = vmatpush2.msra.mxu0 0.0
  %736 = vmatprep.subr.mxu0 0.0
  %737 = vmatpush2.msra.mxu0 0.0
  %738 = vmatprep.subr.mxu0 0.0
  %739 = vmatpush2.msra.mxu0 0.0
  %740 = vmatprep.subr.mxu0 0.0
  %741 = vmatpush2.msra.mxu0 0.0
  %742 = vmatprep.subr.mxu0 0.0
  %743 = vmatpush2.msra.mxu0 0.0
  %744 = vmatprep.subr.mxu0 0.0
  %745 = vmatpush2.msra.mxu0 0.0
  %746 = vmatprep.subr.mxu0 0.0
  %747 = vmatpush2.msra.mxu0 0.0
  %748 = vmatprep.subr.mxu0 0.0
  %749 = vmatpush2.msra.mxu0 0.0
  %750 = vmatprep.subr.mxu0 0.0
  %751 = vmatpush2.msra.mxu0 0.0
  %752 = vmatprep.subr.mxu0 0.0
  %753 = vmatpush2.msra.mxu0 0.0
  %754 = vmatprep.subr.mxu0 0.0
  %755 = vmatpush2.msra.mxu0 0.0
  %756 = vmatprep.subr.mxu0 0.0
  %757 = vmatpush2.msra.mxu0 0.0
  %758 = vmatprep.mubr.f32.mxu0 0.0
  %759 = vmatmul.mubr.f32.gmra.mxu0 %v669
  %v760 = vpop.f32.mrf.mxu0
  %v761 = vadd.f32 %v692, %v760
  %v762 = vpop.f32.mrf.mxu0
  %763 = vmatprep.mubr.f32.mxu0 0.0
  %764 = vmatmul.mubr.f32.gmra.mxu0 %v670
  %v765 = vpop.f32.mrf.mxu0
  %v766 = vadd.f32 %v692, %v765
  %v767 = vpop.f32.mrf.mxu0
  %768 = vdwg.mxu0
  %s769 = scalar_lea.vmem %s5, 128
  %v770 = vld [vmem:[%s769] sm:$0xff]
  %v771 = vld [vmem:[%s769 + $0x8] sm:$0xff]
  %v772 = vld [vmem:[%s769 + $0x10] sm:$0xff]
  %v773 = vld [vmem:[%s769 + $0x18] sm:$0xff]
  %v774 = vld [vmem:[%s769 + $0x20] sm:$0xff]
  %v775 = vld [vmem:[%s769 + $0x28] sm:$0xff]
  %v776 = vld [vmem:[%s769 + $0x30] sm:$0xff]
  %v777 = vld [vmem:[%s769 + $0x38] sm:$0xff]
  %v778 = vld [vmem:[%s769 + $0x40] sm:$0xff]
  %v779 = vld [vmem:[%s769 + $0x48] sm:$0xff]
  %v780 = vld [vmem:[%s769 + $0x50] sm:$0xff]
  %v781 = vld [vmem:[%s769 + $0x58] sm:$0xff]
  %v782 = vld [vmem:[%s769 + $0x60] sm:$0xff]
  %v783 = vld [vmem:[%s769 + $0x68] sm:$0xff]
  %v784 = vld [vmem:[%s769 + $0x70] sm:$0xff]
  %v785 = vld [vmem:[%s769 + $0x78] sm:$0xff]
  %s786 = scalar_lea.vmem %s6, 1
  %v787 = vld [vmem:[%s786] sm:$0x1]
  %v789 = vlaneseq
  %v790 = vshrl.u32 %v789, 7
  %v791 = vsub.s32 0, %v790
  %v792 = vrot.slane %v787, %v791
  %794 = vmatprep.subr.mxu0 0.0
  %795 = vmatpush1.msra.mxu0 %v785
  %796 = vmatprep.subr.mxu0 0.0
  %797 = vmatpush1.msra.mxu0 %v784
  %798 = vmatprep.subr.mxu0 0.0
  %799 = vmatpush1.msra.mxu0 %v783
  %800 = vmatprep.subr.mxu0 0.0
  %801 = vmatpush1.msra.mxu0 %v782
  %802 = vmatprep.subr.mxu0 0.0
  %803 = vmatpush1.msra.mxu0 %v781
  %804 = vmatprep.subr.mxu0 0.0
  %805 = vmatpush1.msra.mxu0 %v780
  %806 = vmatprep.subr.mxu0 0.0
  %807 = vmatpush1.msra.mxu0 %v779
  %808 = vmatprep.subr.mxu0 0.0
  %809 = vmatpush1.msra.mxu0 %v778
  %810 = vmatprep.subr.mxu0 0.0
  %811 = vmatpush1.msra.mxu0 %v777
  %812 = vmatprep.subr.mxu0 0.0
  %813 = vmatpush1.msra.mxu0 %v776
  %814 = vmatprep.subr.mxu0 0.0
  %815 = vmatpush1.msra.mxu0 %v775
  %816 = vmatprep.subr.mxu0 0.0
  %817 = vmatpush1.msra.mxu0 %v774
  %818 = vmatprep.subr.mxu0 0.0
  %819 = vmatpush1.msra.mxu0 %v773
  %820 = vmatprep.subr.mxu0 0.0
  %821 = vmatpush1.msra.mxu0 %v772
  %822 = vmatprep.subr.mxu0 0.0
  %823 = vmatpush1.msra.mxu0 %v771
  %824 = vmatprep.subr.mxu0 0.0
  %825 = vmatpush1.msra.mxu0 %v770
  %826 = vmatprep.subr.mxu0 0.0
  %827 = vmatpush2.msra.mxu0 0.0
  %828 = vmatprep.subr.mxu0 0.0
  %829 = vmatpush2.msra.mxu0 0.0
  %830 = vmatprep.subr.mxu0 0.0
  %831 = vmatpush2.msra.mxu0 0.0
  %832 = vmatprep.subr.mxu0 0.0
  %833 = vmatpush2.msra.mxu0 0.0
  %834 = vmatprep.subr.mxu0 0.0
  %835 = vmatpush2.msra.mxu0 0.0
  %836 = vmatprep.subr.mxu0 0.0
  %837 = vmatpush2.msra.mxu0 0.0
  %838 = vmatprep.subr.mxu0 0.0
  %839 = vmatpush2.msra.mxu0 0.0
  %840 = vmatprep.subr.mxu0 0.0
  %841 = vmatpush2.msra.mxu0 0.0
  %842 = vmatprep.subr.mxu0 0.0
  %843 = vmatpush2.msra.mxu0 0.0
  %844 = vmatprep.subr.mxu0 0.0
  %845 = vmatpush2.msra.mxu0 0.0
  %846 = vmatprep.subr.mxu0 0.0
  %847 = vmatpush2.msra.mxu0 0.0
  %848 = vmatprep.subr.mxu0 0.0
  %849 = vmatpush2.msra.mxu0 0.0
  %850 = vmatprep.subr.mxu0 0.0
  %851 = vmatpush2.msra.mxu0 0.0
  %852 = vmatprep.subr.mxu0 0.0
  %853 = vmatpush2.msra.mxu0 0.0
  %854 = vmatprep.subr.mxu0 0.0
  %855 = vmatpush2.msra.mxu0 0.0
  %856 = vmatprep.subr.mxu0 0.0
  %857 = vmatpush2.msra.mxu0 0.0
  %858 = vmatprep.mubr.f32.mxu0 0.0
  %859 = vmatmul.mubr.f32.gmra.mxu0 %v761
  %v860 = vpop.f32.mrf.mxu0
  %v861 = vadd.f32 %v792, %v860
  %v862 = vpop.f32.mrf.mxu0
  %863 = vmatprep.mubr.f32.mxu0 0.0
  %864 = vmatmul.mubr.f32.gmra.mxu0 %v766
  %v865 = vpop.f32.mrf.mxu0
  %v866 = vadd.f32 %v792, %v865
  %v867 = vpop.f32.mrf.mxu0
  %868 = vdwg.mxu0
  %s869 = scalar_lea.vmem %s7, 128
  %v870 = vld [vmem:[%s869] sm:$0xff]
  %v871 = vld [vmem:[%s869 + $0x8] sm:$0xff]
  %v872 = vld [vmem:[%s869 + $0x10] sm:$0xff]
  %v873 = vld [vmem:[%s869 + $0x18] sm:$0xff]
  %v874 = vld [vmem:[%s869 + $0x20] sm:$0xff]
  %v875 = vld [vmem:[%s869 + $0x28] sm:$0xff]
  %v876 = vld [vmem:[%s869 + $0x30] sm:$0xff]
  %v877 = vld [vmem:[%s869 + $0x38] sm:$0xff]
  %v878 = vld [vmem:[%s869 + $0x40] sm:$0xff]
  %v879 = vld [vmem:[%s869 + $0x48] sm:$0xff]
  %v880 = vld [vmem:[%s869 + $0x50] sm:$0xff]
  %v881 = vld [vmem:[%s869 + $0x58] sm:$0xff]
  %v882 = vld [vmem:[%s869 + $0x60] sm:$0xff]
  %v883 = vld [vmem:[%s869 + $0x68] sm:$0xff]
  %v884 = vld [vmem:[%s869 + $0x70] sm:$0xff]
  %v885 = vld [vmem:[%s869 + $0x78] sm:$0xff]
  %s886 = scalar_lea.vmem %s8, 1
  %v887 = vld [vmem:[%s886] sm:$0x1]
  %v889 = vlaneseq
  %v890 = vshrl.u32 %v889, 7
  %v891 = vsub.s32 0, %v890
  %v892 = vrot.slane %v887, %v891
  %894 = vmatprep.subr.mxu0 0.0
  %895 = vmatpush1.msra.mxu0 %v885
  %896 = vmatprep.subr.mxu0 0.0
  %897 = vmatpush1.msra.mxu0 %v884
  %898 = vmatprep.subr.mxu0 0.0
  %899 = vmatpush1.msra.mxu0 %v883
  %900 = vmatprep.subr.mxu0 0.0
  %901 = vmatpush1.msra.mxu0 %v882
  %902 = vmatprep.subr.mxu0 0.0
  %903 = vmatpush1.msra.mxu0 %v881
  %904 = vmatprep.subr.mxu0 0.0
  %905 = vmatpush1.msra.mxu0 %v880
  %906 = vmatprep.subr.mxu0 0.0
  %907 = vmatpush1.msra.mxu0 %v879
  %908 = vmatprep.subr.mxu0 0.0
  %909 = vmatpush1.msra.mxu0 %v878
  %910 = vmatprep.subr.mxu0 0.0
  %911 = vmatpush1.msra.mxu0 %v877
  %912 = vmatprep.subr.mxu0 0.0
  %913 = vmatpush1.msra.mxu0 %v876
  %914 = vmatprep.subr.mxu0 0.0
  %915 = vmatpush1.msra.mxu0 %v875
  %916 = vmatprep.subr.mxu0 0.0
  %917 = vmatpush1.msra.mxu0 %v874
  %918 = vmatprep.subr.mxu0 0.0
  %919 = vmatpush1.msra.mxu0 %v873
  %920 = vmatprep.subr.mxu0 0.0
  %921 = vmatpush1.msra.mxu0 %v872
  %922 = vmatprep.subr.mxu0 0.0
  %923 = vmatpush1.msra.mxu0 %v871
  %924 = vmatprep.subr.mxu0 0.0
  %925 = vmatpush1.msra.mxu0 %v870
  %926 = vmatprep.subr.mxu0 0.0
  %927 = vmatpush2.msra.mxu0 0.0
  %928 = vmatprep.subr.mxu0 0.0
  %929 = vmatpush2.msra.mxu0 0.0
  %930 = vmatprep.subr.mxu0 0.0
  %931 = vmatpush2.msra.mxu0 0.0
  %932 = vmatprep.subr.mxu0 0.0
  %933 = vmatpush2.msra.mxu0 0.0
  %934 = vmatprep.subr.mxu0 0.0
  %935 = vmatpush2.msra.mxu0 0.0
  %936 = vmatprep.subr.mxu0 0.0
  %937 = vmatpush2.msra.mxu0 0.0
  %938 = vmatprep.subr.mxu0 0.0
  %939 = vmatpush2.msra.mxu0 0.0
  %940 = vmatprep.subr.mxu0 0.0
  %941 = vmatpush2.msra.mxu0 0.0
  %942 = vmatprep.subr.mxu0 0.0
  %943 = vmatpush2.msra.mxu0 0.0
  %944 = vmatprep.subr.mxu0 0.0
  %945 = vmatpush2.msra.mxu0 0.0
  %946 = vmatprep.subr.mxu0 0.0
  %947 = vmatpush2.msra.mxu0 0.0
  %948 = vmatprep.subr.mxu0 0.0
  %949 = vmatpush2.msra.mxu0 0.0
  %950 = vmatprep.subr.mxu0 0.0
  %951 = vmatpush2.msra.mxu0 0.0
  %952 = vmatprep.subr.mxu0 0.0
  %953 = vmatpush2.msra.mxu0 0.0
  %954 = vmatprep.subr.mxu0 0.0
  %955 = vmatpush2.msra.mxu0 0.0
  %956 = vmatprep.subr.mxu0 0.0
  %957 = vmatpush2.msra.mxu0 0.0
  %958 = vmatprep.mubr.f32.mxu0 0.0
  %959 = vmatmul.mubr.f32.gmra.mxu0 %v77
  %v960 = vpop.f32.mrf.mxu0
  %v961 = vadd.f32 %v892, %v960
  %v962 = vpop.f32.mrf.mxu0
  %963 = vmatprep.mubr.f32.mxu0 0.0
  %964 = vmatmul.mubr.f32.gmra.mxu0 %v79
  %v965 = vpop.f32.mrf.mxu0
  %v966 = vadd.f32 %v892, %v965
  %v967 = vpop.f32.mrf.mxu0
  %968 = vdwg.mxu0
  %vm969 = vcmp.gt.f32.partialorder %v961, 20.0
  %vm970 = vcmp.gt.f32.partialorder %v966, 20.0
  %v971 = vmin.f32 %v961, 20.0
  %v972 = vmin.f32 %v966, 20.0
  %v973 = vmul.f32 %v971, 1.442695
  %v974 = vpow.pop %v973
  %v975 = vmul.f32 %v972, 1.442695
  %v976 = vpow.pop %v975
  %v977 = vadd.f32 %v974, 1.0
  %v978 = vlog2.pop %v977
  %v979 = vmul.f32 %v978, 0.6931472
  %v980 = vmul.f32 -0.5, %v974
  %v981 = vadd.f32 %v980, 1.0
  %v982 = vmul.f32 %v981, %v974
  %v983 = vand.u32 2147483647, %v974
  %vm984 = vcmp.lt.f32.partialorder %v983, 0.0004427343
  %v985 = vsel %vm984, %v982, %v979
  %v986 = vadd.f32 %v976, 1.0
  %v987 = vlog2.pop %v986
  %v988 = vmul.f32 %v987, 0.6931472
  %v989 = vmul.f32 -0.5, %v976
  %v990 = vadd.f32 %v989, 1.0
  %v991 = vmul.f32 %v990, %v976
  %v992 = vand.u32 2147483647, %v976
  %vm993 = vcmp.lt.f32.partialorder %v992, 0.0004427343
  %v994 = vsel %vm993, %v991, %v988
  %v995 = vsel %vm969, %v961, %v985
  %v996 = vsel %vm970, %v966, %v994
  %v997 = vsub.f32 %v995, 0.6931472
  %v998 = vsub.f32 %v996, 0.6931472
  %s999 = scalar_lea.vmem %s9, 128
  %v1000 = vld [vmem:[%s999] sm:$0xff]
  %v1001 = vld [vmem:[%s999 + $0x8] sm:$0xff]
  %v1002 = vld [vmem:[%s999 + $0x10] sm:$0xff]
  %v1003 = vld [vmem:[%s999 + $0x18] sm:$0xff]
  %v1004 = vld [vmem:[%s999 + $0x20] sm:$0xff]
  %v1005 = vld [vmem:[%s999 + $0x28] sm:$0xff]
  %v1006 = vld [vmem:[%s999 + $0x30] sm:$0xff]
  %v1007 = vld [vmem:[%s999 + $0x38] sm:$0xff]
  %v1008 = vld [vmem:[%s999 + $0x40] sm:$0xff]
  %v1009 = vld [vmem:[%s999 + $0x48] sm:$0xff]
  %v1010 = vld [vmem:[%s999 + $0x50] sm:$0xff]
  %v1011 = vld [vmem:[%s999 + $0x58] sm:$0xff]
  %v1012 = vld [vmem:[%s999 + $0x60] sm:$0xff]
  %v1013 = vld [vmem:[%s999 + $0x68] sm:$0xff]
  %v1014 = vld [vmem:[%s999 + $0x70] sm:$0xff]
  %v1015 = vld [vmem:[%s999 + $0x78] sm:$0xff]
  %s1016 = scalar_lea.vmem %s10, 1
  %v1017 = vld [vmem:[%s1016] sm:$0x1]
  %v1019 = vlaneseq
  %v1020 = vshrl.u32 %v1019, 7
  %v1021 = vsub.s32 0, %v1020
  %v1022 = vrot.slane %v1017, %v1021
  %1024 = vmatprep.subr.mxu0 0.0
  %1025 = vmatpush1.msra.mxu0 %v1015
  %1026 = vmatprep.subr.mxu0 0.0
  %1027 = vmatpush1.msra.mxu0 %v1014
  %1028 = vmatprep.subr.mxu0 0.0
  %1029 = vmatpush1.msra.mxu0 %v1013
  %1030 = vmatprep.subr.mxu0 0.0
  %1031 = vmatpush1.msra.mxu0 %v1012
  %1032 = vmatprep.subr.mxu0 0.0
  %1033 = vmatpush1.msra.mxu0 %v1011
  %1034 = vmatprep.subr.mxu0 0.0
  %1035 = vmatpush1.msra.mxu0 %v1010
  %1036 = vmatprep.subr.mxu0 0.0
  %1037 = vmatpush1.msra.mxu0 %v1009
  %1038 = vmatprep.subr.mxu0 0.0
  %1039 = vmatpush1.msra.mxu0 %v1008
  %1040 = vmatprep.subr.mxu0 0.0
  %1041 = vmatpush1.msra.mxu0 %v1007
  %1042 = vmatprep.subr.mxu0 0.0
  %1043 = vmatpush1.msra.mxu0 %v1006
  %1044 = vmatprep.subr.mxu0 0.0
  %1045 = vmatpush1.msra.mxu0 %v1005
  %1046 = vmatprep.subr.mxu0 0.0
  %1047 = vmatpush1.msra.mxu0 %v1004
  %1048 = vmatprep.subr.mxu0 0.0
  %1049 = vmatpush1.msra.mxu0 %v1003
  %1050 = vmatprep.subr.mxu0 0.0
  %1051 = vmatpush1.msra.mxu0 %v1002
  %1052 = vmatprep.subr.mxu0 0.0
  %1053 = vmatpush1.msra.mxu0 %v1001
  %1054 = vmatprep.subr.mxu0 0.0
  %1055 = vmatpush1.msra.mxu0 %v1000
  %1056 = vmatprep.subr.mxu0 0.0
  %1057 = vmatpush2.msra.mxu0 0.0
  %1058 = vmatprep.subr.mxu0 0.0
  %1059 = vmatpush2.msra.mxu0 0.0
  %1060 = vmatprep.subr.mxu0 0.0
  %1061 = vmatpush2.msra.mxu0 0.0
  %1062 = vmatprep.subr.mxu0 0.0
  %1063 = vmatpush2.msra.mxu0 0.0
  %1064 = vmatprep.subr.mxu0 0.0
  %1065 = vmatpush2.msra.mxu0 0.0
  %1066 = vmatprep.subr.mxu0 0.0
  %1067 = vmatpush2.msra.mxu0 0.0
  %1068 = vmatprep.subr.mxu0 0.0
  %1069 = vmatpush2.msra.mxu0 0.0
  %1070 = vmatprep.subr.mxu0 0.0
  %1071 = vmatpush2.msra.mxu0 0.0
  %1072 = vmatprep.subr.mxu0 0.0
  %1073 = vmatpush2.msra.mxu0 0.0
  %1074 = vmatprep.subr.mxu0 0.0
  %1075 = vmatpush2.msra.mxu0 0.0
  %1076 = vmatprep.subr.mxu0 0.0
  %1077 = vmatpush2.msra.mxu0 0.0
  %1078 = vmatprep.subr.mxu0 0.0
  %1079 = vmatpush2.msra.mxu0 0.0
  %1080 = vmatprep.subr.mxu0 0.0
  %1081 = vmatpush2.msra.mxu0 0.0
  %1082 = vmatprep.subr.mxu0 0.0
  %1083 = vmatpush2.msra.mxu0 0.0
  %1084 = vmatprep.subr.mxu0 0.0
  %1085 = vmatpush2.msra.mxu0 0.0
  %1086 = vmatprep.subr.mxu0 0.0
  %1087 = vmatpush2.msra.mxu0 0.0
  %1088 = vmatprep.mubr.f32.mxu0 0.0
  %1089 = vmatmul.mubr.f32.gmra.mxu0 %v997
  %v1090 = vpop.f32.mrf.mxu0
  %v1091 = vadd.f32 %v1022, %v1090
  %v1092 = vpop.f32.mrf.mxu0
  %1093 = vmatprep.mubr.f32.mxu0 0.0
  %1094 = vmatmul.mubr.f32.gmra.mxu0 %v998
  %v1095 = vpop.f32.mrf.mxu0
  %v1096 = vadd.f32 %v1022, %v1095
  %v1097 = vpop.f32.mrf.mxu0
  %1098 = vdwg.mxu0
  %vm1099 = vcmp.gt.f32.partialorder %v1091, 20.0
  %vm1100 = vcmp.gt.f32.partialorder %v1096, 20.0
  %v1101 = vmin.f32 %v1091, 20.0
  %v1102 = vmin.f32 %v1096, 20.0
  %v1103 = vmul.f32 %v1101, 1.442695
  %v1104 = vpow.pop %v1103
  %v1105 = vmul.f32 %v1102, 1.442695
  %v1106 = vpow.pop %v1105
  %v1107 = vadd.f32 %v1104, 1.0
  %v1108 = vlog2.pop %v1107
  %v1109 = vmul.f32 %v1108, 0.6931472
  %v1110 = vmul.f32 -0.5, %v1104
  %v1111 = vadd.f32 %v1110, 1.0
  %v1112 = vmul.f32 %v1111, %v1104
  %v1113 = vand.u32 2147483647, %v1104
  %vm1114 = vcmp.lt.f32.partialorder %v1113, 0.0004427343
  %v1115 = vsel %vm1114, %v1112, %v1109
  %v1116 = vadd.f32 %v1106, 1.0
  %v1117 = vlog2.pop %v1116
  %v1118 = vmul.f32 %v1117, 0.6931472
  %v1119 = vmul.f32 -0.5, %v1106
  %v1120 = vadd.f32 %v1119, 1.0
  %v1121 = vmul.f32 %v1120, %v1106
  %v1122 = vand.u32 2147483647, %v1106
  %vm1123 = vcmp.lt.f32.partialorder %v1122, 0.0004427343
  %v1124 = vsel %vm1123, %v1121, %v1118
  %v1125 = vsel %vm1099, %v1091, %v1115
  %v1126 = vsel %vm1100, %v1096, %v1124
  %v1127 = vsub.f32 %v1125, 0.6931472
  %v1128 = vsub.f32 %v1126, 0.6931472
  %v1129 = vpack.c.bf16 %v866, %v861
  %1130 = vmatprep.subr.bf16.mxu0 0
  %1131 = vmatpush1.bf16.msra.mxu0 0
  %1132 = vmatprep.subr.bf16.mxu0 0
  %1133 = vmatpush1.bf16.msra.mxu0 0
  %1134 = vmatprep.subr.bf16.mxu0 0
  %1135 = vmatpush1.bf16.msra.mxu0 0
  %1136 = vmatprep.subr.bf16.mxu0 0
  %1137 = vmatpush1.bf16.msra.mxu0 0
  %1138 = vmatprep.subr.bf16.mxu0 0
  %1139 = vmatpush1.bf16.msra.mxu0 0
  %1140 = vmatprep.subr.bf16.mxu0 0
  %1141 = vmatpush1.bf16.msra.mxu0 0
  %1142 = vmatprep.subr.bf16.mxu0 0
  %1143 = vmatpush1.bf16.msra.mxu0 0
  %1144 = vmatprep.subr.bf16.mxu0 0
  %1145 = vmatpush1.bf16.msra.mxu0 %v1129
  %1146 = vmatprep.subr.bf16.mxu0 0
  %1147 = vmatpush2.bf16.msra.mxu0 0
  %1148 = vmatprep.subr.bf16.mxu0 0
  %1149 = vmatpush2.bf16.msra.mxu0 0
  %1150 = vmatprep.subr.bf16.mxu0 0
  %1151 = vmatpush2.bf16.msra.mxu0 0
  %1152 = vmatprep.subr.bf16.mxu0 0
  %1153 = vmatpush2.bf16.msra.mxu0 0
  %1154 = vmatprep.subr.bf16.mxu0 0
  %1155 = vmatpush2.bf16.msra.mxu0 0
  %1156 = vmatprep.subr.bf16.mxu0 0
  %1157 = vmatpush2.bf16.msra.mxu0 0
  %1158 = vmatprep.subr.bf16.mxu0 0
  %1159 = vmatpush2.bf16.msra.mxu0 0
  %1160 = vmatprep.subr.bf16.mxu0 0
  %1161 = vmatpush2.bf16.msra.mxu0 0
  %1162 = vmatprep.mubr.bf16.mxu0 0
  %1163 = vmatmul.mubr.bf16.gmra.mxu0 %v448
  %v1164 = vpop.f32.mrf.mxu0
  %v1165 = vadd.f32 0.0, %v1164
  %v1166 = vpop.f32.mrf.mxu0
  %v1167 = vpop.f32.mrf.mxu0
  %v1168 = vadd.f32 0.0, %v1167
  %v1169 = vpop.f32.mrf.mxu0
  %1170 = vdwg.mxu0
  %v1171 = vmul.f32 %v1165, %v1127
  %v1172 = vmul.f32 %v1168, %v1128
  %v1173 = vpack.c.bf16 %v1172, %v1171
  %1174 = vmatprep.subr.bf16.mxu0 0
  %1175 = vmatpush1.bf16.msra.mxu0 0
  %1176 = vmatprep.subr.bf16.mxu0 0
  %1177 = vmatpush1.bf16.msra.mxu0 0
  %1178 = vmatprep.subr.bf16.mxu0 0
  %1179 = vmatpush1.bf16.msra.mxu0 0
  %1180 = vmatprep.subr.bf16.mxu0 0
  %1181 = vmatpush1.bf16.msra.mxu0 0
  %1182 = vmatprep.subr.bf16.mxu0 0
  %1183 = vmatpush1.bf16.msra.mxu0 0
  %1184 = vmatprep.subr.bf16.mxu0 0
  %1185 = vmatpush1.bf16.msra.mxu0 0
  %1186 = vmatprep.subr.bf16.mxu0 0
  %1187 = vmatpush1.bf16.msra.mxu0 0
  %1188 = vmatprep.subr.bf16.mxu0 0
  %1189 = vmatpush1.bf16.msra.mxu0 %v1173
  %1190 = vmatprep.subr.bf16.mxu0 0
  %1191 = vmatpush2.bf16.msra.mxu0 0
  %1192 = vmatprep.subr.bf16.mxu0 0
  %1193 = vmatpush2.bf16.msra.mxu0 0
  %1194 = vmatprep.subr.bf16.mxu0 0
  %1195 = vmatpush2.bf16.msra.mxu0 0
  %1196 = vmatprep.subr.bf16.mxu0 0
  %1197 = vmatpush2.bf16.msra.mxu0 0
  %1198 = vmatprep.subr.bf16.mxu0 0
  %1199 = vmatpush2.bf16.msra.mxu0 0
  %1200 = vmatprep.subr.bf16.mxu0 0
  %1201 = vmatpush2.bf16.msra.mxu0 0
  %1202 = vmatprep.subr.bf16.mxu0 0
  %1203 = vmatpush2.bf16.msra.mxu0 0
  %1204 = vmatprep.subr.bf16.mxu0 0
  %1205 = vmatpush2.bf16.msra.mxu0 0
  %1206 = vmatprep.mubr.bf16.mxu0 0
  %1207 = vmatmul.mubr.bf16.gmra.mxu0 %v500
  %v1208 = vpop.f32.mrf.mxu0
  %v1209 = vadd.f32 0.0, %v1208
  %v1210 = vpop.f32.mrf.mxu0
  %v1211 = vpop.f32.mrf.mxu0
  %v1212 = vadd.f32 0.0, %v1211
  %v1213 = vpop.f32.mrf.mxu0
  %1214 = vdwg.mxu0
  %s1215 = scalar_lea.vmem %s11, 128
  %v1216 = vld [vmem:[%s1215] sm:$0xff]
  %v1217 = vld [vmem:[%s1215 + $0x8] sm:$0xff]
  %v1218 = vld [vmem:[%s1215 + $0x10] sm:$0xff]
  %v1219 = vld [vmem:[%s1215 + $0x18] sm:$0xff]
  %v1220 = vld [vmem:[%s1215 + $0x20] sm:$0xff]
  %v1221 = vld [vmem:[%s1215 + $0x28] sm:$0xff]
  %v1222 = vld [vmem:[%s1215 + $0x30] sm:$0xff]
  %v1223 = vld [vmem:[%s1215 + $0x38] sm:$0xff]
  %v1224 = vld [vmem:[%s1215 + $0x40] sm:$0xff]
  %v1225 = vld [vmem:[%s1215 + $0x48] sm:$0xff]
  %v1226 = vld [vmem:[%s1215 + $0x50] sm:$0xff]
  %v1227 = vld [vmem:[%s1215 + $0x58] sm:$0xff]
  %v1228 = vld [vmem:[%s1215 + $0x60] sm:$0xff]
  %v1229 = vld [vmem:[%s1215 + $0x68] sm:$0xff]
  %v1230 = vld [vmem:[%s1215 + $0x70] sm:$0xff]
  %v1231 = vld [vmem:[%s1215 + $0x78] sm:$0xff]
  %s1232 = scalar_lea.vmem %s12, 1
  %v1233 = vld [vmem:[%s1232] sm:$0x1]
  %v1235 = vlaneseq
  %v1236 = vshrl.u32 %v1235, 7
  %v1237 = vsub.s32 0, %v1236
  %v1238 = vrot.slane %v1233, %v1237
  %1240 = vmatprep.subr.mxu0 0.0
  %1241 = vmatpush1.msra.mxu0 %v1231
  %1242 = vmatprep.subr.mxu0 0.0
  %1243 = vmatpush1.msra.mxu0 %v1230
  %1244 = vmatprep.subr.mxu0 0.0
  %1245 = vmatpush1.msra.mxu0 %v1229
  %1246 = vmatprep.subr.mxu0 0.0
  %1247 = vmatpush1.msra.mxu0 %v1228
  %1248 = vmatprep.subr.mxu0 0.0
  %1249 = vmatpush1.msra.mxu0 %v1227
  %1250 = vmatprep.subr.mxu0 0.0
  %1251 = vmatpush1.msra.mxu0 %v1226
  %1252 = vmatprep.subr.mxu0 0.0
  %1253 = vmatpush1.msra.mxu0 %v1225
  %1254 = vmatprep.subr.mxu0 0.0
  %1255 = vmatpush1.msra.mxu0 %v1224
  %1256 = vmatprep.subr.mxu0 0.0
  %1257 = vmatpush1.msra.mxu0 %v1223
  %1258 = vmatprep.subr.mxu0 0.0
  %1259 = vmatpush1.msra.mxu0 %v1222
  %1260 = vmatprep.subr.mxu0 0.0
  %1261 = vmatpush1.msra.mxu0 %v1221
  %1262 = vmatprep.subr.mxu0 0.0
  %1263 = vmatpush1.msra.mxu0 %v1220
  %1264 = vmatprep.subr.mxu0 0.0
  %1265 = vmatpush1.msra.mxu0 %v1219
  %1266 = vmatprep.subr.mxu0 0.0
  %1267 = vmatpush1.msra.mxu0 %v1218
  %1268 = vmatprep.subr.mxu0 0.0
  %1269 = vmatpush1.msra.mxu0 %v1217
  %1270 = vmatprep.subr.mxu0 0.0
  %1271 = vmatpush1.msra.mxu0 %v1216
  %1272 = vmatprep.subr.mxu0 0.0
  %1273 = vmatpush2.msra.mxu0 0.0
  %1274 = vmatprep.subr.mxu0 0.0
  %1275 = vmatpush2.msra.mxu0 0.0
  %1276 = vmatprep.subr.mxu0 0.0
  %1277 = vmatpush2.msra.mxu0 0.0
  %1278 = vmatprep.subr.mxu0 0.0
  %1279 = vmatpush2.msra.mxu0 0.0
  %1280 = vmatprep.subr.mxu0 0.0
  %1281 = vmatpush2.msra.mxu0 0.0
  %1282 = vmatprep.subr.mxu0 0.0
  %1283 = vmatpush2.msra.mxu0 0.0
  %1284 = vmatprep.subr.mxu0 0.0
  %1285 = vmatpush2.msra.mxu0 0.0
  %1286 = vmatprep.subr.mxu0 0.0
  %1287 = vmatpush2.msra.mxu0 0.0
  %1288 = vmatprep.subr.mxu0 0.0
  %1289 = vmatpush2.msra.mxu0 0.0
  %1290 = vmatprep.subr.mxu0 0.0
  %1291 = vmatpush2.msra.mxu0 0.0
  %1292 = vmatprep.subr.mxu0 0.0
  %1293 = vmatpush2.msra.mxu0 0.0
  %1294 = vmatprep.subr.mxu0 0.0
  %1295 = vmatpush2.msra.mxu0 0.0
  %1296 = vmatprep.subr.mxu0 0.0
  %1297 = vmatpush2.msra.mxu0 0.0
  %1298 = vmatprep.subr.mxu0 0.0
  %1299 = vmatpush2.msra.mxu0 0.0
  %1300 = vmatprep.subr.mxu0 0.0
  %1301 = vmatpush2.msra.mxu0 0.0
  %1302 = vmatprep.subr.mxu0 0.0
  %1303 = vmatpush2.msra.mxu0 0.0
  %1304 = vmatprep.mubr.f32.mxu0 0.0
  %1305 = vmatmul.mubr.f32.gmra.mxu0 %v1209
  %v1306 = vpop.f32.mrf.mxu0
  %v1307 = vadd.f32 %v1238, %v1306
  %v1308 = vpop.f32.mrf.mxu0
  %1309 = vmatprep.mubr.f32.mxu0 0.0
  %1310 = vmatmul.mubr.f32.gmra.mxu0 %v1212
  %v1311 = vpop.f32.mrf.mxu0
  %v1312 = vadd.f32 %v1238, %v1311
  %v1313 = vpop.f32.mrf.mxu0
  %1314 = vdwg.mxu0
  %vm1315 = vcmp.gt.f32.partialorder %v1307, 20.0
  %vm1316 = vcmp.gt.f32.partialorder %v1312, 20.0
  %v1317 = vmin.f32 %v1307, 20.0
  %v1318 = vmin.f32 %v1312, 20.0
  %v1319 = vmul.f32 %v1317, 1.442695
  %v1320 = vpow.pop %v1319
  %v1321 = vmul.f32 %v1318, 1.442695
  %v1322 = vpow.pop %v1321
  %v1323 = vadd.f32 %v1320, 1.0
  %v1324 = vlog2.pop %v1323
  %v1325 = vmul.f32 %v1324, 0.6931472
  %v1326 = vmul.f32 -0.5, %v1320
  %v1327 = vadd.f32 %v1326, 1.0
  %v1328 = vmul.f32 %v1327, %v1320
  %v1329 = vand.u32 2147483647, %v1320
  %vm1330 = vcmp.lt.f32.partialorder %v1329, 0.0004427343
  %v1331 = vsel %vm1330, %v1328, %v1325
  %v1332 = vadd.f32 %v1322, 1.0
  %v1333 = vlog2.pop %v1332
  %v1334 = vmul.f32 %v1333, 0.6931472
  %v1335 = vmul.f32 -0.5, %v1322
  %v1336 = vadd.f32 %v1335, 1.0
  %v1337 = vmul.f32 %v1336, %v1322
  %v1338 = vand.u32 2147483647, %v1322
  %vm1339 = vcmp.lt.f32.partialorder %v1338, 0.0004427343
  %v1340 = vsel %vm1339, %v1337, %v1334
  %v1341 = vsel %vm1315, %v1307, %v1331
  %v1342 = vsel %vm1316, %v1312, %v1340
  %v1343 = vsub.f32 %v1341, 0.6931472
  %v1344 = vsub.f32 %v1342, 0.6931472
  %s1345 = scalar_lea.vmem %s13, 128
  %v1346 = vld [vmem:[%s1345] sm:$0xff]
  %v1347 = vld [vmem:[%s1345 + $0x8] sm:$0xff]
  %v1348 = vld [vmem:[%s1345 + $0x10] sm:$0xff]
  %v1349 = vld [vmem:[%s1345 + $0x18] sm:$0xff]
  %v1350 = vld [vmem:[%s1345 + $0x20] sm:$0xff]
  %v1351 = vld [vmem:[%s1345 + $0x28] sm:$0xff]
  %v1352 = vld [vmem:[%s1345 + $0x30] sm:$0xff]
  %v1353 = vld [vmem:[%s1345 + $0x38] sm:$0xff]
  %v1354 = vld [vmem:[%s1345 + $0x40] sm:$0xff]
  %v1355 = vld [vmem:[%s1345 + $0x48] sm:$0xff]
  %v1356 = vld [vmem:[%s1345 + $0x50] sm:$0xff]
  %v1357 = vld [vmem:[%s1345 + $0x58] sm:$0xff]
  %v1358 = vld [vmem:[%s1345 + $0x60] sm:$0xff]
  %v1359 = vld [vmem:[%s1345 + $0x68] sm:$0xff]
  %v1360 = vld [vmem:[%s1345 + $0x70] sm:$0xff]
  %v1361 = vld [vmem:[%s1345 + $0x78] sm:$0xff]
  %s1362 = scalar_lea.vmem %s14, 1
  %v1363 = vld [vmem:[%s1362] sm:$0x1]
  %v1365 = vlaneseq
  %v1366 = vshrl.u32 %v1365, 7
  %v1367 = vsub.s32 0, %v1366
  %v1368 = vrot.slane %v1363, %v1367
  %1370 = vmatprep.subr.mxu0 0.0
  %1371 = vmatpush1.msra.mxu0 %v1361
  %1372 = vmatprep.subr.mxu0 0.0
  %1373 = vmatpush1.msra.mxu0 %v1360
  %1374 = vmatprep.subr.mxu0 0.0
  %1375 = vmatpush1.msra.mxu0 %v1359
  %1376 = vmatprep.subr.mxu0 0.0
  %1377 = vmatpush1.msra.mxu0 %v1358
  %1378 = vmatprep.subr.mxu0 0.0
  %1379 = vmatpush1.msra.mxu0 %v1357
  %1380 = vmatprep.subr.mxu0 0.0
  %1381 = vmatpush1.msra.mxu0 %v1356
  %1382 = vmatprep.subr.mxu0 0.0
  %1383 = vmatpush1.msra.mxu0 %v1355
  %1384 = vmatprep.subr.mxu0 0.0
  %1385 = vmatpush1.msra.mxu0 %v1354
  %1386 = vmatprep.subr.mxu0 0.0
  %1387 = vmatpush1.msra.mxu0 %v1353
  %1388 = vmatprep.subr.mxu0 0.0
  %1389 = vmatpush1.msra.mxu0 %v1352
  %1390 = vmatprep.subr.mxu0 0.0
  %1391 = vmatpush1.msra.mxu0 %v1351
  %1392 = vmatprep.subr.mxu0 0.0
  %1393 = vmatpush1.msra.mxu0 %v1350
  %1394 = vmatprep.subr.mxu0 0.0
  %1395 = vmatpush1.msra.mxu0 %v1349
  %1396 = vmatprep.subr.mxu0 0.0
  %1397 = vmatpush1.msra.mxu0 %v1348
  %1398 = vmatprep.subr.mxu0 0.0
  %1399 = vmatpush1.msra.mxu0 %v1347
  %1400 = vmatprep.subr.mxu0 0.0
  %1401 = vmatpush1.msra.mxu0 %v1346
  %1402 = vmatprep.subr.mxu0 0.0
  %1403 = vmatpush2.msra.mxu0 0.0
  %1404 = vmatprep.subr.mxu0 0.0
  %1405 = vmatpush2.msra.mxu0 0.0
  %1406 = vmatprep.subr.mxu0 0.0
  %1407 = vmatpush2.msra.mxu0 0.0
  %1408 = vmatprep.subr.mxu0 0.0
  %1409 = vmatpush2.msra.mxu0 0.0
  %1410 = vmatprep.subr.mxu0 0.0
  %1411 = vmatpush2.msra.mxu0 0.0
  %1412 = vmatprep.subr.mxu0 0.0
  %1413 = vmatpush2.msra.mxu0 0.0
  %1414 = vmatprep.subr.mxu0 0.0
  %1415 = vmatpush2.msra.mxu0 0.0
  %1416 = vmatprep.subr.mxu0 0.0
  %1417 = vmatpush2.msra.mxu0 0.0
  %1418 = vmatprep.subr.mxu0 0.0
  %1419 = vmatpush2.msra.mxu0 0.0
  %1420 = vmatprep.subr.mxu0 0.0
  %1421 = vmatpush2.msra.mxu0 0.0
  %1422 = vmatprep.subr.mxu0 0.0
  %1423 = vmatpush2.msra.mxu0 0.0
  %1424 = vmatprep.subr.mxu0 0.0
  %1425 = vmatpush2.msra.mxu0 0.0
  %1426 = vmatprep.subr.mxu0 0.0
  %1427 = vmatpush2.msra.mxu0 0.0
  %1428 = vmatprep.subr.mxu0 0.0
  %1429 = vmatpush2.msra.mxu0 0.0
  %1430 = vmatprep.subr.mxu0 0.0
  %1431 = vmatpush2.msra.mxu0 0.0
  %1432 = vmatprep.subr.mxu0 0.0
  %1433 = vmatpush2.msra.mxu0 0.0
  %1434 = vmatprep.mubr.f32.mxu0 0.0
  %1435 = vmatmul.mubr.f32.gmra.mxu0 %v1343
  %v1436 = vpop.f32.mrf.mxu0
  %v1437 = vadd.f32 %v1368, %v1436
  %v1438 = vpop.f32.mrf.mxu0
  %1439 = vmatprep.mubr.f32.mxu0 0.0
  %1440 = vmatmul.mubr.f32.gmra.mxu0 %v1344
  %v1441 = vpop.f32.mrf.mxu0
  %v1442 = vadd.f32 %v1368, %v1441
  %v1443 = vpop.f32.mrf.mxu0
  %1444 = vdwg.mxu0
  %s1445 = scalar_lea.vmem %s5, 256
  %v1446 = vld [vmem:[%s1445] sm:$0xff]
  %v1447 = vld [vmem:[%s1445 + $0x8] sm:$0xff]
  %v1448 = vld [vmem:[%s1445 + $0x10] sm:$0xff]
  %v1449 = vld [vmem:[%s1445 + $0x18] sm:$0xff]
  %v1450 = vld [vmem:[%s1445 + $0x20] sm:$0xff]
  %v1451 = vld [vmem:[%s1445 + $0x28] sm:$0xff]
  %v1452 = vld [vmem:[%s1445 + $0x30] sm:$0xff]
  %v1453 = vld [vmem:[%s1445 + $0x38] sm:$0xff]
  %v1454 = vld [vmem:[%s1445 + $0x40] sm:$0xff]
  %v1455 = vld [vmem:[%s1445 + $0x48] sm:$0xff]
  %v1456 = vld [vmem:[%s1445 + $0x50] sm:$0xff]
  %v1457 = vld [vmem:[%s1445 + $0x58] sm:$0xff]
  %v1458 = vld [vmem:[%s1445 + $0x60] sm:$0xff]
  %v1459 = vld [vmem:[%s1445 + $0x68] sm:$0xff]
  %v1460 = vld [vmem:[%s1445 + $0x70] sm:$0xff]
  %v1461 = vld [vmem:[%s1445 + $0x78] sm:$0xff]
  %s1462 = scalar_lea.vmem %s6, 2
  %v1463 = vld [vmem:[%s1462] sm:$0x1]
  %v1465 = vlaneseq
  %v1466 = vshrl.u32 %v1465, 7
  %v1467 = vsub.s32 0, %v1466
  %v1468 = vrot.slane %v1463, %v1467
  %1470 = vmatprep.subr.mxu0 0.0
  %1471 = vmatpush1.msra.mxu0 %v1461
  %1472 = vmatprep.subr.mxu0 0.0
  %1473 = vmatpush1.msra.mxu0 %v1460
  %1474 = vmatprep.subr.mxu0 0.0
  %1475 = vmatpush1.msra.mxu0 %v1459
  %1476 = vmatprep.subr.mxu0 0.0
  %1477 = vmatpush1.msra.mxu0 %v1458
  %1478 = vmatprep.subr.mxu0 0.0
  %1479 = vmatpush1.msra.mxu0 %v1457
  %1480 = vmatprep.subr.mxu0 0.0
  %1481 = vmatpush1.msra.mxu0 %v1456
  %1482 = vmatprep.subr.mxu0 0.0
  %1483 = vmatpush1.msra.mxu0 %v1455
  %1484 = vmatprep.subr.mxu0 0.0
  %1485 = vmatpush1.msra.mxu0 %v1454
  %1486 = vmatprep.subr.mxu0 0.0
  %1487 = vmatpush1.msra.mxu0 %v1453
  %1488 = vmatprep.subr.mxu0 0.0
  %1489 = vmatpush1.msra.mxu0 %v1452
  %1490 = vmatprep.subr.mxu0 0.0
  %1491 = vmatpush1.msra.mxu0 %v1451
  %1492 = vmatprep.subr.mxu0 0.0
  %1493 = vmatpush1.msra.mxu0 %v1450
  %1494 = vmatprep.subr.mxu0 0.0
  %1495 = vmatpush1.msra.mxu0 %v1449
  %1496 = vmatprep.subr.mxu0 0.0
  %1497 = vmatpush1.msra.mxu0 %v1448
  %1498 = vmatprep.subr.mxu0 0.0
  %1499 = vmatpush1.msra.mxu0 %v1447
  %1500 = vmatprep.subr.mxu0 0.0
  %1501 = vmatpush1.msra.mxu0 %v1446
  %1502 = vmatprep.subr.mxu0 0.0
  %1503 = vmatpush2.msra.mxu0 0.0
  %1504 = vmatprep.subr.mxu0 0.0
  %1505 = vmatpush2.msra.mxu0 0.0
  %1506 = vmatprep.subr.mxu0 0.0
  %1507 = vmatpush2.msra.mxu0 0.0
  %1508 = vmatprep.subr.mxu0 0.0
  %1509 = vmatpush2.msra.mxu0 0.0
  %1510 = vmatprep.subr.mxu0 0.0
  %1511 = vmatpush2.msra.mxu0 0.0
  %1512 = vmatprep.subr.mxu0 0.0
  %1513 = vmatpush2.msra.mxu0 0.0
  %1514 = vmatprep.subr.mxu0 0.0
  %1515 = vmatpush2.msra.mxu0 0.0
  %1516 = vmatprep.subr.mxu0 0.0
  %1517 = vmatpush2.msra.mxu0 0.0
  %1518 = vmatprep.subr.mxu0 0.0
  %1519 = vmatpush2.msra.mxu0 0.0
  %1520 = vmatprep.subr.mxu0 0.0
  %1521 = vmatpush2.msra.mxu0 0.0
  %1522 = vmatprep.subr.mxu0 0.0
  %1523 = vmatpush2.msra.mxu0 0.0
  %1524 = vmatprep.subr.mxu0 0.0
  %1525 = vmatpush2.msra.mxu0 0.0
  %1526 = vmatprep.subr.mxu0 0.0
  %1527 = vmatpush2.msra.mxu0 0.0
  %1528 = vmatprep.subr.mxu0 0.0
  %1529 = vmatpush2.msra.mxu0 0.0
  %1530 = vmatprep.subr.mxu0 0.0
  %1531 = vmatpush2.msra.mxu0 0.0
  %1532 = vmatprep.subr.mxu0 0.0
  %1533 = vmatpush2.msra.mxu0 0.0
  %1534 = vmatprep.mubr.f32.mxu0 0.0
  %1535 = vmatmul.mubr.f32.gmra.mxu0 %v1437
  %v1536 = vpop.f32.mrf.mxu0
  %v1537 = vadd.f32 %v1468, %v1536
  %v1538 = vpop.f32.mrf.mxu0
  %1539 = vmatprep.mubr.f32.mxu0 0.0
  %1540 = vmatmul.mubr.f32.gmra.mxu0 %v1442
  %v1541 = vpop.f32.mrf.mxu0
  %v1542 = vadd.f32 %v1468, %v1541
  %v1543 = vpop.f32.mrf.mxu0
  %1544 = vdwg.mxu0
  %s1545 = scalar_lea.vmem %s7, 256
  %v1546 = vld [vmem:[%s1545] sm:$0xff]
  %v1547 = vld [vmem:[%s1545 + $0x8] sm:$0xff]
  %v1548 = vld [vmem:[%s1545 + $0x10] sm:$0xff]
  %v1549 = vld [vmem:[%s1545 + $0x18] sm:$0xff]
  %v1550 = vld [vmem:[%s1545 + $0x20] sm:$0xff]
  %v1551 = vld [vmem:[%s1545 + $0x28] sm:$0xff]
  %v1552 = vld [vmem:[%s1545 + $0x30] sm:$0xff]
  %v1553 = vld [vmem:[%s1545 + $0x38] sm:$0xff]
  %v1554 = vld [vmem:[%s1545 + $0x40] sm:$0xff]
  %v1555 = vld [vmem:[%s1545 + $0x48] sm:$0xff]
  %v1556 = vld [vmem:[%s1545 + $0x50] sm:$0xff]
  %v1557 = vld [vmem:[%s1545 + $0x58] sm:$0xff]
  %v1558 = vld [vmem:[%s1545 + $0x60] sm:$0xff]
  %v1559 = vld [vmem:[%s1545 + $0x68] sm:$0xff]
  %v1560 = vld [vmem:[%s1545 + $0x70] sm:$0xff]
  %v1561 = vld [vmem:[%s1545 + $0x78] sm:$0xff]
  %s1562 = scalar_lea.vmem %s8, 2
  %v1563 = vld [vmem:[%s1562] sm:$0x1]
  %v1565 = vlaneseq
  %v1566 = vshrl.u32 %v1565, 7
  %v1567 = vsub.s32 0, %v1566
  %v1568 = vrot.slane %v1563, %v1567
  %1570 = vmatprep.subr.mxu0 0.0
  %1571 = vmatpush1.msra.mxu0 %v1561
  %1572 = vmatprep.subr.mxu0 0.0
  %1573 = vmatpush1.msra.mxu0 %v1560
  %1574 = vmatprep.subr.mxu0 0.0
  %1575 = vmatpush1.msra.mxu0 %v1559
  %1576 = vmatprep.subr.mxu0 0.0
  %1577 = vmatpush1.msra.mxu0 %v1558
  %1578 = vmatprep.subr.mxu0 0.0
  %1579 = vmatpush1.msra.mxu0 %v1557
  %1580 = vmatprep.subr.mxu0 0.0
  %1581 = vmatpush1.msra.mxu0 %v1556
  %1582 = vmatprep.subr.mxu0 0.0
  %1583 = vmatpush1.msra.mxu0 %v1555
  %1584 = vmatprep.subr.mxu0 0.0
  %1585 = vmatpush1.msra.mxu0 %v1554
  %1586 = vmatprep.subr.mxu0 0.0
  %1587 = vmatpush1.msra.mxu0 %v1553
  %1588 = vmatprep.subr.mxu0 0.0
  %1589 = vmatpush1.msra.mxu0 %v1552
  %1590 = vmatprep.subr.mxu0 0.0
  %1591 = vmatpush1.msra.mxu0 %v1551
  %1592 = vmatprep.subr.mxu0 0.0
  %1593 = vmatpush1.msra.mxu0 %v1550
  %1594 = vmatprep.subr.mxu0 0.0
  %1595 = vmatpush1.msra.mxu0 %v1549
  %1596 = vmatprep.subr.mxu0 0.0
  %1597 = vmatpush1.msra.mxu0 %v1548
  %1598 = vmatprep.subr.mxu0 0.0
  %1599 = vmatpush1.msra.mxu0 %v1547
  %1600 = vmatprep.subr.mxu0 0.0
  %1601 = vmatpush1.msra.mxu0 %v1546
  %1602 = vmatprep.subr.mxu0 0.0
  %1603 = vmatpush2.msra.mxu0 0.0
  %1604 = vmatprep.subr.mxu0 0.0
  %1605 = vmatpush2.msra.mxu0 0.0
  %1606 = vmatprep.subr.mxu0 0.0
  %1607 = vmatpush2.msra.mxu0 0.0
  %1608 = vmatprep.subr.mxu0 0.0
  %1609 = vmatpush2.msra.mxu0 0.0
  %1610 = vmatprep.subr.mxu0 0.0
  %1611 = vmatpush2.msra.mxu0 0.0
  %1612 = vmatprep.subr.mxu0 0.0
  %1613 = vmatpush2.msra.mxu0 0.0
  %1614 = vmatprep.subr.mxu0 0.0
  %1615 = vmatpush2.msra.mxu0 0.0
  %1616 = vmatprep.subr.mxu0 0.0
  %1617 = vmatpush2.msra.mxu0 0.0
  %1618 = vmatprep.subr.mxu0 0.0
  %1619 = vmatpush2.msra.mxu0 0.0
  %1620 = vmatprep.subr.mxu0 0.0
  %1621 = vmatpush2.msra.mxu0 0.0
  %1622 = vmatprep.subr.mxu0 0.0
  %1623 = vmatpush2.msra.mxu0 0.0
  %1624 = vmatprep.subr.mxu0 0.0
  %1625 = vmatpush2.msra.mxu0 0.0
  %1626 = vmatprep.subr.mxu0 0.0
  %1627 = vmatpush2.msra.mxu0 0.0
  %1628 = vmatprep.subr.mxu0 0.0
  %1629 = vmatpush2.msra.mxu0 0.0
  %1630 = vmatprep.subr.mxu0 0.0
  %1631 = vmatpush2.msra.mxu0 0.0
  %1632 = vmatprep.subr.mxu0 0.0
  %1633 = vmatpush2.msra.mxu0 0.0
  %1634 = vmatprep.mubr.f32.mxu0 0.0
  %1635 = vmatmul.mubr.f32.gmra.mxu0 %v77
  %v1636 = vpop.f32.mrf.mxu0
  %v1637 = vadd.f32 %v1568, %v1636
  %v1638 = vpop.f32.mrf.mxu0
  %1639 = vmatprep.mubr.f32.mxu0 0.0
  %1640 = vmatmul.mubr.f32.gmra.mxu0 %v79
  %v1641 = vpop.f32.mrf.mxu0
  %v1642 = vadd.f32 %v1568, %v1641
  %v1643 = vpop.f32.mrf.mxu0
  %1644 = vdwg.mxu0
  %vm1645 = vcmp.gt.f32.partialorder %v1637, 20.0
  %vm1646 = vcmp.gt.f32.partialorder %v1642, 20.0
  %v1647 = vmin.f32 %v1637, 20.0
  %v1648 = vmin.f32 %v1642, 20.0
  %v1649 = vmul.f32 %v1647, 1.442695
  %v1650 = vpow.pop %v1649
  %v1651 = vmul.f32 %v1648, 1.442695
  %v1652 = vpow.pop %v1651
  %v1653 = vadd.f32 %v1650, 1.0
  %v1654 = vlog2.pop %v1653
  %v1655 = vmul.f32 %v1654, 0.6931472
  %v1656 = vmul.f32 -0.5, %v1650
  %v1657 = vadd.f32 %v1656, 1.0
  %v1658 = vmul.f32 %v1657, %v1650
  %v1659 = vand.u32 2147483647, %v1650
  %vm1660 = vcmp.lt.f32.partialorder %v1659, 0.0004427343
  %v1661 = vsel %vm1660, %v1658, %v1655
  %v1662 = vadd.f32 %v1652, 1.0
  %v1663 = vlog2.pop %v1662
  %v1664 = vmul.f32 %v1663, 0.6931472
  %v1665 = vmul.f32 -0.5, %v1652
  %v1666 = vadd.f32 %v1665, 1.0
  %v1667 = vmul.f32 %v1666, %v1652
  %v1668 = vand.u32 2147483647, %v1652
  %vm1669 = vcmp.lt.f32.partialorder %v1668, 0.0004427343
  %v1670 = vsel %vm1669, %v1667, %v1664
  %v1671 = vsel %vm1645, %v1637, %v1661
  %v1672 = vsel %vm1646, %v1642, %v1670
  %v1673 = vsub.f32 %v1671, 0.6931472
  %v1674 = vsub.f32 %v1672, 0.6931472
  %s1675 = scalar_lea.vmem %s9, 256
  %v1676 = vld [vmem:[%s1675] sm:$0xff]
  %v1677 = vld [vmem:[%s1675 + $0x8] sm:$0xff]
  %v1678 = vld [vmem:[%s1675 + $0x10] sm:$0xff]
  %v1679 = vld [vmem:[%s1675 + $0x18] sm:$0xff]
  %v1680 = vld [vmem:[%s1675 + $0x20] sm:$0xff]
  %v1681 = vld [vmem:[%s1675 + $0x28] sm:$0xff]
  %v1682 = vld [vmem:[%s1675 + $0x30] sm:$0xff]
  %v1683 = vld [vmem:[%s1675 + $0x38] sm:$0xff]
  %v1684 = vld [vmem:[%s1675 + $0x40] sm:$0xff]
  %v1685 = vld [vmem:[%s1675 + $0x48] sm:$0xff]
  %v1686 = vld [vmem:[%s1675 + $0x50] sm:$0xff]
  %v1687 = vld [vmem:[%s1675 + $0x58] sm:$0xff]
  %v1688 = vld [vmem:[%s1675 + $0x60] sm:$0xff]
  %v1689 = vld [vmem:[%s1675 + $0x68] sm:$0xff]
  %v1690 = vld [vmem:[%s1675 + $0x70] sm:$0xff]
  %v1691 = vld [vmem:[%s1675 + $0x78] sm:$0xff]
  %s1692 = scalar_lea.vmem %s10, 2
  %v1693 = vld [vmem:[%s1692] sm:$0x1]
  %v1695 = vlaneseq
  %v1696 = vshrl.u32 %v1695, 7
  %v1697 = vsub.s32 0, %v1696
  %v1698 = vrot.slane %v1693, %v1697
  %1700 = vmatprep.subr.mxu0 0.0
  %1701 = vmatpush1.msra.mxu0 %v1691
  %1702 = vmatprep.subr.mxu0 0.0
  %1703 = vmatpush1.msra.mxu0 %v1690
  %1704 = vmatprep.subr.mxu0 0.0
  %1705 = vmatpush1.msra.mxu0 %v1689
  %1706 = vmatprep.subr.mxu0 0.0
  %1707 = vmatpush1.msra.mxu0 %v1688
  %1708 = vmatprep.subr.mxu0 0.0
  %1709 = vmatpush1.msra.mxu0 %v1687
  %1710 = vmatprep.subr.mxu0 0.0
  %1711 = vmatpush1.msra.mxu0 %v1686
  %1712 = vmatprep.subr.mxu0 0.0
  %1713 = vmatpush1.msra.mxu0 %v1685
  %1714 = vmatprep.subr.mxu0 0.0
  %1715 = vmatpush1.msra.mxu0 %v1684
  %1716 = vmatprep.subr.mxu0 0.0
  %1717 = vmatpush1.msra.mxu0 %v1683
  %1718 = vmatprep.subr.mxu0 0.0
  %1719 = vmatpush1.msra.mxu0 %v1682
  %1720 = vmatprep.subr.mxu0 0.0
  %1721 = vmatpush1.msra.mxu0 %v1681
  %1722 = vmatprep.subr.mxu0 0.0
  %1723 = vmatpush1.msra.mxu0 %v1680
  %1724 = vmatprep.subr.mxu0 0.0
  %1725 = vmatpush1.msra.mxu0 %v1679
  %1726 = vmatprep.subr.mxu0 0.0
  %1727 = vmatpush1.msra.mxu0 %v1678
  %1728 = vmatprep.subr.mxu0 0.0
  %1729 = vmatpush1.msra.mxu0 %v1677
  %1730 = vmatprep.subr.mxu0 0.0
  %1731 = vmatpush1.msra.mxu0 %v1676
  %1732 = vmatprep.subr.mxu0 0.0
  %1733 = vmatpush2.msra.mxu0 0.0
  %1734 = vmatprep.subr.mxu0 0.0
  %1735 = vmatpush2.msra.mxu0 0.0
  %1736 = vmatprep.subr.mxu0 0.0
  %1737 = vmatpush2.msra.mxu0 0.0
  %1738 = vmatprep.subr.mxu0 0.0
  %1739 = vmatpush2.msra.mxu0 0.0
  %1740 = vmatprep.subr.mxu0 0.0
  %1741 = vmatpush2.msra.mxu0 0.0
  %1742 = vmatprep.subr.mxu0 0.0
  %1743 = vmatpush2.msra.mxu0 0.0
  %1744 = vmatprep.subr.mxu0 0.0
  %1745 = vmatpush2.msra.mxu0 0.0
  %1746 = vmatprep.subr.mxu0 0.0
  %1747 = vmatpush2.msra.mxu0 0.0
  %1748 = vmatprep.subr.mxu0 0.0
  %1749 = vmatpush2.msra.mxu0 0.0
  %1750 = vmatprep.subr.mxu0 0.0
  %1751 = vmatpush2.msra.mxu0 0.0
  %1752 = vmatprep.subr.mxu0 0.0
  %1753 = vmatpush2.msra.mxu0 0.0
  %1754 = vmatprep.subr.mxu0 0.0
  %1755 = vmatpush2.msra.mxu0 0.0
  %1756 = vmatprep.subr.mxu0 0.0
  %1757 = vmatpush2.msra.mxu0 0.0
  %1758 = vmatprep.subr.mxu0 0.0
  %1759 = vmatpush2.msra.mxu0 0.0
  %1760 = vmatprep.subr.mxu0 0.0
  %1761 = vmatpush2.msra.mxu0 0.0
  %1762 = vmatprep.subr.mxu0 0.0
  %1763 = vmatpush2.msra.mxu0 0.0
  %1764 = vmatprep.mubr.f32.mxu0 0.0
  %1765 = vmatmul.mubr.f32.gmra.mxu0 %v1673
  %v1766 = vpop.f32.mrf.mxu0
  %v1767 = vadd.f32 %v1698, %v1766
  %v1768 = vpop.f32.mrf.mxu0
  %1769 = vmatprep.mubr.f32.mxu0 0.0
  %1770 = vmatmul.mubr.f32.gmra.mxu0 %v1674
  %v1771 = vpop.f32.mrf.mxu0
  %v1772 = vadd.f32 %v1698, %v1771
  %v1773 = vpop.f32.mrf.mxu0
  %1774 = vdwg.mxu0
  %vm1775 = vcmp.gt.f32.partialorder %v1767, 20.0
  %vm1776 = vcmp.gt.f32.partialorder %v1772, 20.0
  %v1777 = vmin.f32 %v1767, 20.0
  %v1778 = vmin.f32 %v1772, 20.0
  %v1779 = vmul.f32 %v1777, 1.442695
  %v1780 = vpow.pop %v1779
  %v1781 = vmul.f32 %v1778, 1.442695
  %v1782 = vpow.pop %v1781
  %v1783 = vadd.f32 %v1780, 1.0
  %v1784 = vlog2.pop %v1783
  %v1785 = vmul.f32 %v1784, 0.6931472
  %v1786 = vmul.f32 -0.5, %v1780
  %v1787 = vadd.f32 %v1786, 1.0
  %v1788 = vmul.f32 %v1787, %v1780
  %v1789 = vand.u32 2147483647, %v1780
  %vm1790 = vcmp.lt.f32.partialorder %v1789, 0.0004427343
  %v1791 = vsel %vm1790, %v1788, %v1785
  %v1792 = vadd.f32 %v1782, 1.0
  %v1793 = vlog2.pop %v1792
  %v1794 = vmul.f32 %v1793, 0.6931472
  %v1795 = vmul.f32 -0.5, %v1782
  %v1796 = vadd.f32 %v1795, 1.0
  %v1797 = vmul.f32 %v1796, %v1782
  %v1798 = vand.u32 2147483647, %v1782
  %vm1799 = vcmp.lt.f32.partialorder %v1798, 0.0004427343
  %v1800 = vsel %vm1799, %v1797, %v1794
  %v1801 = vsel %vm1775, %v1767, %v1791
  %v1802 = vsel %vm1776, %v1772, %v1800
  %v1803 = vsub.f32 %v1801, 0.6931472
  %v1804 = vsub.f32 %v1802, 0.6931472
  %v1805 = vpack.c.bf16 %v1542, %v1537
  %1806 = vmatprep.subr.bf16.mxu0 0
  %1807 = vmatpush1.bf16.msra.mxu0 0
  %1808 = vmatprep.subr.bf16.mxu0 0
  %1809 = vmatpush1.bf16.msra.mxu0 0
  %1810 = vmatprep.subr.bf16.mxu0 0
  %1811 = vmatpush1.bf16.msra.mxu0 0
  %1812 = vmatprep.subr.bf16.mxu0 0
  %1813 = vmatpush1.bf16.msra.mxu0 0
  %1814 = vmatprep.subr.bf16.mxu0 0
  %1815 = vmatpush1.bf16.msra.mxu0 0
  %1816 = vmatprep.subr.bf16.mxu0 0
  %1817 = vmatpush1.bf16.msra.mxu0 0
  %1818 = vmatprep.subr.bf16.mxu0 0
  %1819 = vmatpush1.bf16.msra.mxu0 0
  %1820 = vmatprep.subr.bf16.mxu0 0
  %1821 = vmatpush1.bf16.msra.mxu0 %v1805
  %1822 = vmatprep.subr.bf16.mxu0 0
  %1823 = vmatpush2.bf16.msra.mxu0 0
  %1824 = vmatprep.subr.bf16.mxu0 0
  %1825 = vmatpush2.bf16.msra.mxu0 0
  %1826 = vmatprep.subr.bf16.mxu0 0
  %1827 = vmatpush2.bf16.msra.mxu0 0
  %1828 = vmatprep.subr.bf16.mxu0 0
  %1829 = vmatpush2.bf16.msra.mxu0 0
  %1830 = vmatprep.subr.bf16.mxu0 0
  %1831 = vmatpush2.bf16.msra.mxu0 0
  %1832 = vmatprep.subr.bf16.mxu0 0
  %1833 = vmatpush2.bf16.msra.mxu0 0
  %1834 = vmatprep.subr.bf16.mxu0 0
  %1835 = vmatpush2.bf16.msra.mxu0 0
  %1836 = vmatprep.subr.bf16.mxu0 0
  %1837 = vmatpush2.bf16.msra.mxu0 0
  %1838 = vmatprep.mubr.bf16.mxu0 0
  %1839 = vmatmul.mubr.bf16.gmra.mxu0 %v448
  %v1840 = vpop.f32.mrf.mxu0
  %v1841 = vadd.f32 0.0, %v1840
  %v1842 = vpop.f32.mrf.mxu0
  %v1843 = vpop.f32.mrf.mxu0
  %v1844 = vadd.f32 0.0, %v1843
  %v1845 = vpop.f32.mrf.mxu0
  %1846 = vdwg.mxu0
  %v1847 = vmul.f32 %v1841, %v1803
  %v1848 = vmul.f32 %v1844, %v1804
  %v1849 = vpack.c.bf16 %v1848, %v1847
  %1850 = vmatprep.subr.bf16.mxu0 0
  %1851 = vmatpush1.bf16.msra.mxu0 0
  %1852 = vmatprep.subr.bf16.mxu0 0
  %1853 = vmatpush1.bf16.msra.mxu0 0
  %1854 = vmatprep.subr.bf16.mxu0 0
  %1855 = vmatpush1.bf16.msra.mxu0 0
  %1856 = vmatprep.subr.bf16.mxu0 0
  %1857 = vmatpush1.bf16.msra.mxu0 0
  %1858 = vmatprep.subr.bf16.mxu0 0
  %1859 = vmatpush1.bf16.msra.mxu0 0
  %1860 = vmatprep.subr.bf16.mxu0 0
  %1861 = vmatpush1.bf16.msra.mxu0 0
  %1862 = vmatprep.subr.bf16.mxu0 0
  %1863 = vmatpush1.bf16.msra.mxu0 0
  %1864 = vmatprep.subr.bf16.mxu0 0
  %1865 = vmatpush1.bf16.msra.mxu0 %v1849
  %1866 = vmatprep.subr.bf16.mxu0 0
  %1867 = vmatpush2.bf16.msra.mxu0 0
  %1868 = vmatprep.subr.bf16.mxu0 0
  %1869 = vmatpush2.bf16.msra.mxu0 0
  %1870 = vmatprep.subr.bf16.mxu0 0
  %1871 = vmatpush2.bf16.msra.mxu0 0
  %1872 = vmatprep.subr.bf16.mxu0 0
  %1873 = vmatpush2.bf16.msra.mxu0 0
  %1874 = vmatprep.subr.bf16.mxu0 0
  %1875 = vmatpush2.bf16.msra.mxu0 0
  %1876 = vmatprep.subr.bf16.mxu0 0
  %1877 = vmatpush2.bf16.msra.mxu0 0
  %1878 = vmatprep.subr.bf16.mxu0 0
  %1879 = vmatpush2.bf16.msra.mxu0 0
  %1880 = vmatprep.subr.bf16.mxu0 0
  %1881 = vmatpush2.bf16.msra.mxu0 0
  %1882 = vmatprep.mubr.bf16.mxu0 0
  %1883 = vmatmul.mubr.bf16.gmra.mxu0 %v500
  %v1884 = vpop.f32.mrf.mxu0
  %v1885 = vadd.f32 0.0, %v1884
  %v1886 = vpop.f32.mrf.mxu0
  %v1887 = vpop.f32.mrf.mxu0
  %v1888 = vadd.f32 0.0, %v1887
  %v1889 = vpop.f32.mrf.mxu0
  %1890 = vdwg.mxu0
  %s1891 = scalar_lea.vmem %s11, 256
  %v1892 = vld [vmem:[%s1891] sm:$0xff]
  %v1893 = vld [vmem:[%s1891 + $0x8] sm:$0xff]
  %v1894 = vld [vmem:[%s1891 + $0x10] sm:$0xff]
  %v1895 = vld [vmem:[%s1891 + $0x18] sm:$0xff]
  %v1896 = vld [vmem:[%s1891 + $0x20] sm:$0xff]
  %v1897 = vld [vmem:[%s1891 + $0x28] sm:$0xff]
  %v1898 = vld [vmem:[%s1891 + $0x30] sm:$0xff]
  %v1899 = vld [vmem:[%s1891 + $0x38] sm:$0xff]
  %v1900 = vld [vmem:[%s1891 + $0x40] sm:$0xff]
  %v1901 = vld [vmem:[%s1891 + $0x48] sm:$0xff]
  %v1902 = vld [vmem:[%s1891 + $0x50] sm:$0xff]
  %v1903 = vld [vmem:[%s1891 + $0x58] sm:$0xff]
  %v1904 = vld [vmem:[%s1891 + $0x60] sm:$0xff]
  %v1905 = vld [vmem:[%s1891 + $0x68] sm:$0xff]
  %v1906 = vld [vmem:[%s1891 + $0x70] sm:$0xff]
  %v1907 = vld [vmem:[%s1891 + $0x78] sm:$0xff]
  %s1908 = scalar_lea.vmem %s12, 2
  %v1909 = vld [vmem:[%s1908] sm:$0x1]
  %v1911 = vlaneseq
  %v1912 = vshrl.u32 %v1911, 7
  %v1913 = vsub.s32 0, %v1912
  %v1914 = vrot.slane %v1909, %v1913
  %1916 = vmatprep.subr.mxu0 0.0
  %1917 = vmatpush1.msra.mxu0 %v1907
  %1918 = vmatprep.subr.mxu0 0.0
  %1919 = vmatpush1.msra.mxu0 %v1906
  %1920 = vmatprep.subr.mxu0 0.0
  %1921 = vmatpush1.msra.mxu0 %v1905
  %1922 = vmatprep.subr.mxu0 0.0
  %1923 = vmatpush1.msra.mxu0 %v1904
  %1924 = vmatprep.subr.mxu0 0.0
  %1925 = vmatpush1.msra.mxu0 %v1903
  %1926 = vmatprep.subr.mxu0 0.0
  %1927 = vmatpush1.msra.mxu0 %v1902
  %1928 = vmatprep.subr.mxu0 0.0
  %1929 = vmatpush1.msra.mxu0 %v1901
  %1930 = vmatprep.subr.mxu0 0.0
  %1931 = vmatpush1.msra.mxu0 %v1900
  %1932 = vmatprep.subr.mxu0 0.0
  %1933 = vmatpush1.msra.mxu0 %v1899
  %1934 = vmatprep.subr.mxu0 0.0
  %1935 = vmatpush1.msra.mxu0 %v1898
  %1936 = vmatprep.subr.mxu0 0.0
  %1937 = vmatpush1.msra.mxu0 %v1897
  %1938 = vmatprep.subr.mxu0 0.0
  %1939 = vmatpush1.msra.mxu0 %v1896
  %1940 = vmatprep.subr.mxu0 0.0
  %1941 = vmatpush1.msra.mxu0 %v1895
  %1942 = vmatprep.subr.mxu0 0.0
  %1943 = vmatpush1.msra.mxu0 %v1894
  %1944 = vmatprep.subr.mxu0 0.0
  %1945 = vmatpush1.msra.mxu0 %v1893
  %1946 = vmatprep.subr.mxu0 0.0
  %1947 = vmatpush1.msra.mxu0 %v1892
  %1948 = vmatprep.subr.mxu0 0.0
  %1949 = vmatpush2.msra.mxu0 0.0
  %1950 = vmatprep.subr.mxu0 0.0
  %1951 = vmatpush2.msra.mxu0 0.0
  %1952 = vmatprep.subr.mxu0 0.0
  %1953 = vmatpush2.msra.mxu0 0.0
  %1954 = vmatprep.subr.mxu0 0.0
  %1955 = vmatpush2.msra.mxu0 0.0
  %1956 = vmatprep.subr.mxu0 0.0
  %1957 = vmatpush2.msra.mxu0 0.0
  %1958 = vmatprep.subr.mxu0 0.0
  %1959 = vmatpush2.msra.mxu0 0.0
  %1960 = vmatprep.subr.mxu0 0.0
  %1961 = vmatpush2.msra.mxu0 0.0
  %1962 = vmatprep.subr.mxu0 0.0
  %1963 = vmatpush2.msra.mxu0 0.0
  %1964 = vmatprep.subr.mxu0 0.0
  %1965 = vmatpush2.msra.mxu0 0.0
  %1966 = vmatprep.subr.mxu0 0.0
  %1967 = vmatpush2.msra.mxu0 0.0
  %1968 = vmatprep.subr.mxu0 0.0
  %1969 = vmatpush2.msra.mxu0 0.0
  %1970 = vmatprep.subr.mxu0 0.0
  %1971 = vmatpush2.msra.mxu0 0.0
  %1972 = vmatprep.subr.mxu0 0.0
  %1973 = vmatpush2.msra.mxu0 0.0
  %1974 = vmatprep.subr.mxu0 0.0
  %1975 = vmatpush2.msra.mxu0 0.0
  %1976 = vmatprep.subr.mxu0 0.0
  %1977 = vmatpush2.msra.mxu0 0.0
  %1978 = vmatprep.subr.mxu0 0.0
  %1979 = vmatpush2.msra.mxu0 0.0
  %1980 = vmatprep.mubr.f32.mxu0 0.0
  %1981 = vmatmul.mubr.f32.gmra.mxu0 %v1885
  %v1982 = vpop.f32.mrf.mxu0
  %v1983 = vadd.f32 %v1914, %v1982
  %v1984 = vpop.f32.mrf.mxu0
  %1985 = vmatprep.mubr.f32.mxu0 0.0
  %1986 = vmatmul.mubr.f32.gmra.mxu0 %v1888
  %v1987 = vpop.f32.mrf.mxu0
  %v1988 = vadd.f32 %v1914, %v1987
  %v1989 = vpop.f32.mrf.mxu0
  %1990 = vdwg.mxu0
  %vm1991 = vcmp.gt.f32.partialorder %v1983, 20.0
  %vm1992 = vcmp.gt.f32.partialorder %v1988, 20.0
  %v1993 = vmin.f32 %v1983, 20.0
  %v1994 = vmin.f32 %v1988, 20.0
  %v1995 = vmul.f32 %v1993, 1.442695
  %v1996 = vpow.pop %v1995
  %v1997 = vmul.f32 %v1994, 1.442695
  %v1998 = vpow.pop %v1997
  %v1999 = vadd.f32 %v1996, 1.0
  %v2000 = vlog2.pop %v1999
  %v2001 = vmul.f32 %v2000, 0.6931472
  %v2002 = vmul.f32 -0.5, %v1996
  %v2003 = vadd.f32 %v2002, 1.0
  %v2004 = vmul.f32 %v2003, %v1996
  %v2005 = vand.u32 2147483647, %v1996
  %vm2006 = vcmp.lt.f32.partialorder %v2005, 0.0004427343
  %v2007 = vsel %vm2006, %v2004, %v2001
  %v2008 = vadd.f32 %v1998, 1.0
  %v2009 = vlog2.pop %v2008
  %v2010 = vmul.f32 %v2009, 0.6931472
  %v2011 = vmul.f32 -0.5, %v1998
  %v2012 = vadd.f32 %v2011, 1.0
  %v2013 = vmul.f32 %v2012, %v1998
  %v2014 = vand.u32 2147483647, %v1998
  %vm2015 = vcmp.lt.f32.partialorder %v2014, 0.0004427343
  %v2016 = vsel %vm2015, %v2013, %v2010
  %v2017 = vsel %vm1991, %v1983, %v2007
  %v2018 = vsel %vm1992, %v1988, %v2016
  %v2019 = vsub.f32 %v2017, 0.6931472
  %v2020 = vsub.f32 %v2018, 0.6931472
  %s2021 = scalar_lea.vmem %s13, 256
  %v2022 = vld [vmem:[%s2021] sm:$0xff]
  %v2023 = vld [vmem:[%s2021 + $0x8] sm:$0xff]
  %v2024 = vld [vmem:[%s2021 + $0x10] sm:$0xff]
  %v2025 = vld [vmem:[%s2021 + $0x18] sm:$0xff]
  %v2026 = vld [vmem:[%s2021 + $0x20] sm:$0xff]
  %v2027 = vld [vmem:[%s2021 + $0x28] sm:$0xff]
  %v2028 = vld [vmem:[%s2021 + $0x30] sm:$0xff]
  %v2029 = vld [vmem:[%s2021 + $0x38] sm:$0xff]
  %v2030 = vld [vmem:[%s2021 + $0x40] sm:$0xff]
  %v2031 = vld [vmem:[%s2021 + $0x48] sm:$0xff]
  %v2032 = vld [vmem:[%s2021 + $0x50] sm:$0xff]
  %v2033 = vld [vmem:[%s2021 + $0x58] sm:$0xff]
  %v2034 = vld [vmem:[%s2021 + $0x60] sm:$0xff]
  %v2035 = vld [vmem:[%s2021 + $0x68] sm:$0xff]
  %v2036 = vld [vmem:[%s2021 + $0x70] sm:$0xff]
  %v2037 = vld [vmem:[%s2021 + $0x78] sm:$0xff]
  %s2038 = scalar_lea.vmem %s14, 2
  %v2039 = vld [vmem:[%s2038] sm:$0x1]
  %v2041 = vlaneseq
  %v2042 = vshrl.u32 %v2041, 7
  %v2043 = vsub.s32 0, %v2042
  %v2044 = vrot.slane %v2039, %v2043
  %2046 = vmatprep.subr.mxu0 0.0
  %2047 = vmatpush1.msra.mxu0 %v2037
  %2048 = vmatprep.subr.mxu0 0.0
  %2049 = vmatpush1.msra.mxu0 %v2036
  %2050 = vmatprep.subr.mxu0 0.0
  %2051 = vmatpush1.msra.mxu0 %v2035
  %2052 = vmatprep.subr.mxu0 0.0
  %2053 = vmatpush1.msra.mxu0 %v2034
  %2054 = vmatprep.subr.mxu0 0.0
  %2055 = vmatpush1.msra.mxu0 %v2033
  %2056 = vmatprep.subr.mxu0 0.0
  %2057 = vmatpush1.msra.mxu0 %v2032
  %2058 = vmatprep.subr.mxu0 0.0
  %2059 = vmatpush1.msra.mxu0 %v2031
  %2060 = vmatprep.subr.mxu0 0.0
  %2061 = vmatpush1.msra.mxu0 %v2030
  %2062 = vmatprep.subr.mxu0 0.0
  %2063 = vmatpush1.msra.mxu0 %v2029
  %2064 = vmatprep.subr.mxu0 0.0
  %2065 = vmatpush1.msra.mxu0 %v2028
  %2066 = vmatprep.subr.mxu0 0.0
  %2067 = vmatpush1.msra.mxu0 %v2027
  %2068 = vmatprep.subr.mxu0 0.0
  %2069 = vmatpush1.msra.mxu0 %v2026
  %2070 = vmatprep.subr.mxu0 0.0
  %2071 = vmatpush1.msra.mxu0 %v2025
  %2072 = vmatprep.subr.mxu0 0.0
  %2073 = vmatpush1.msra.mxu0 %v2024
  %2074 = vmatprep.subr.mxu0 0.0
  %2075 = vmatpush1.msra.mxu0 %v2023
  %2076 = vmatprep.subr.mxu0 0.0
  %2077 = vmatpush1.msra.mxu0 %v2022
  %2078 = vmatprep.subr.mxu0 0.0
  %2079 = vmatpush2.msra.mxu0 0.0
  %2080 = vmatprep.subr.mxu0 0.0
  %2081 = vmatpush2.msra.mxu0 0.0
  %2082 = vmatprep.subr.mxu0 0.0
  %2083 = vmatpush2.msra.mxu0 0.0
  %2084 = vmatprep.subr.mxu0 0.0
  %2085 = vmatpush2.msra.mxu0 0.0
  %2086 = vmatprep.subr.mxu0 0.0
  %2087 = vmatpush2.msra.mxu0 0.0
  %2088 = vmatprep.subr.mxu0 0.0
  %2089 = vmatpush2.msra.mxu0 0.0
  %2090 = vmatprep.subr.mxu0 0.0
  %2091 = vmatpush2.msra.mxu0 0.0
  %2092 = vmatprep.subr.mxu0 0.0
  %2093 = vmatpush2.msra.mxu0 0.0
  %2094 = vmatprep.subr.mxu0 0.0
  %2095 = vmatpush2.msra.mxu0 0.0
  %2096 = vmatprep.subr.mxu0 0.0
  %2097 = vmatpush2.msra.mxu0 0.0
  %2098 = vmatprep.subr.mxu0 0.0
  %2099 = vmatpush2.msra.mxu0 0.0
  %2100 = vmatprep.subr.mxu0 0.0
  %2101 = vmatpush2.msra.mxu0 0.0
  %2102 = vmatprep.subr.mxu0 0.0
  %2103 = vmatpush2.msra.mxu0 0.0
  %2104 = vmatprep.subr.mxu0 0.0
  %2105 = vmatpush2.msra.mxu0 0.0
  %2106 = vmatprep.subr.mxu0 0.0
  %2107 = vmatpush2.msra.mxu0 0.0
  %2108 = vmatprep.subr.mxu0 0.0
  %2109 = vmatpush2.msra.mxu0 0.0
  %2110 = vmatprep.mubr.f32.mxu0 0.0
  %2111 = vmatmul.mubr.f32.gmra.mxu0 %v2019
  %v2112 = vpop.f32.mrf.mxu0
  %v2113 = vadd.f32 %v2044, %v2112
  %v2114 = vpop.f32.mrf.mxu0
  %2115 = vmatprep.mubr.f32.mxu0 0.0
  %2116 = vmatmul.mubr.f32.gmra.mxu0 %v2020
  %v2117 = vpop.f32.mrf.mxu0
  %v2118 = vadd.f32 %v2044, %v2117
  %v2119 = vpop.f32.mrf.mxu0
  %2120 = vdwg.mxu0
  %2121 = vst [vmem:[%s15] sm:$0xff] %v2113
  %2122 = vst [vmem:[%s15 + $0x8] sm:$0xff] %v2118
  // Predicated region
  $region62: #{schnet_forward.1} parent=0 // pred_check
    _
  $region63: #{schnet_forward.1} parent=0 // pred_check_branch
    %2124 = sbr.rel (0) target = $region65
  $region64: #{schnet_forward.1} parent=0 // pred_region
    _
  $region65: #{schnet_forward.1} parent=0 // pred_fallthru
    _
  // Predicated region
  $region66: #{schnet_forward.1} parent=0 // pred_check
    _
  $region67: #{schnet_forward.1} parent=0 // pred_check_branch
    %2126 = sbr.rel (0) target = $region69
  $region68: #{schnet_forward.1} parent=0 // pred_region
    _
  $region69: #{schnet_forward.1} parent=0 // pred_fallthru
    _

</llo_original>
